<compile_context>
chip_gen: v5e
topology: v5e:2x2
jax: 0.10.0
libtpu: 0.0.40
codegen_flags: <defaults>
</compile_context>

<pallas_src>
import functools
import math

import jax
import jax.numpy as jnp
from jax.experimental import pallas as pl
from jax.experimental.pallas import tpu as pltpu

EPS = 1e-5
PAD = 128                      # lane-dense output feature width
WEIGHT_DTYPE = jnp.bfloat16    # HBM storage dtype for packed weights


def _round_up(n, m):
    return ((n + m - 1) // m) * m


# ----------------------------- in-kernel helpers -----------------------------

def _gelu(x):
    # exact (erf-based) GELU, matching torch.nn.GELU() default
    return 0.5 * x * (1.0 + jax.lax.erf(x * (1.0 / math.sqrt(2.0))))


# --------------------------------- fused kernel --------------------------------

def _make_fused_kernel(n_res_blocks, n_mid, kc):
    """Fully-fused forward kernel for a given block structure.

    kc: contraction width (real hidden width rounded up to the f32 sublane multiple).
    """
    n_stages = 1 + 2 * n_res_blocks + n_mid

    def kernel(x_ref, ws_ref, wst_ref, g_ref, b_ref, wh_ref, bh_ref, o_ref):
        def bn(y, s):
            # training-mode BatchNorm1d: biased variance over the batch axis.
            # Padded columns are exactly 0 -> (y-mean)=0, var=0, rsqrt(eps)*0 = 0 -> stay 0.
            mean = jnp.mean(y, axis=0, keepdims=True)
            var = jnp.mean((y - mean) * (y - mean), axis=0, keepdims=True)
            return (y - mean) * jax.lax.rsqrt(var + EPS) * g_ref[s:s + 1, :] + b_ref[s:s + 1, :]

        def lin_bn(v, s):
            # Linear (bias dropped: cancels in train-mode BN) + BN.
            # Contract only the first kc lanes; the rest of v is exactly zero.
            w = wst_ref[s - 1].astype(jnp.float32)     # (kc, PAD), bf16 -> f32 in-kernel
            y = jnp.dot(v[:, :kc], w, preferred_element_type=jnp.float32)
            return bn(y, s)

        # stem: Linear + BN + GELU (stem weight packed at the real input width)
        w0 = ws_ref[...].astype(jnp.float32)           # (d_in, PAD)
        h = _gelu(bn(jnp.dot(x_ref[...], w0, preferred_element_type=jnp.float32), 0))

        s = 1
        # residual blocks
        for _ in range(n_res_blocks):
            t = _gelu(lin_bn(h, s))
            t = lin_bn(t, s + 1)
            h = _gelu(h + t)
            s += 2
        # middle Linear + BN + GELU stages
        for _ in range(n_mid):
            h = _gelu(lin_bn(h, s))
            s += 1
        assert s == n_stages  # trace-time sanity

        # head: plain Linear (bias kept — not followed by BN)
        wh = wh_ref[...].astype(jnp.float32)           # (kc, PAD)
        y = jnp.dot(h[:, :kc], wh, preferred_element_type=jnp.float32) + bh_ref[...]
        o_ref[...] = y.astype(o_ref.dtype)

    return kernel


# ------------------------------ pallas wrapper ---------------------------------

def improved_dnn_forward(x, packed, *, out_dim, n_res_blocks, n_mid, hidden, pad=PAD):
    ws, wst, g_all, b_all, wh, bh = packed
    n = x.shape[0]
    kc = _round_up(hidden, 8)

    kern = _make_fused_kernel(n_res_blocks, n_mid, kc)
    vmem = lambda: pl.BlockSpec(memory_space=pltpu.MemorySpace.VMEM)

    out = pl.pallas_call(
        kern,
        out_shape=jax.ShapeDtypeStruct((n, pad), jnp.float32),
        in_specs=[vmem() for _ in range(7)],
        out_specs=vmem(),
    )(x.astype(jnp.float32), ws, wst, g_all, b_all, wh, bh)
    # slice the lane-padded head output back to the real width
    return out[:, :out_dim]


# ---------------------------- parameter construction ---------------------------
# Torch-layout params (weights (out,in), 1-D bias/gamma/beta) used by the reference;
# pack_params() pre-transposes, shrinks the contraction dim, casts to bf16 and stacks.

def xavier_uniform(key, fan_out, fan_in):
    bound = math.sqrt(6.0 / (fan_in + fan_out))
    return jax.random.uniform(key, (fan_out, fan_in), jnp.float32, -bound, bound)


def make_linear(key, d_in, d_out):
    return xavier_uniform(key, d_out, d_in), jnp.zeros((d_out,), jnp.float32)


def make_bn(d):
    # PyTorch BatchNorm1d default affine init: gamma = 1, beta = 0
    return jnp.ones((d,), jnp.float32), jnp.zeros((d,), jnp.float32)


def init_improved_dnn(key, layers, n_res_blocks=3):
    keys = iter(jax.random.split(key, 64))
    params = {}
    w, b = make_linear(next(keys), layers[0], layers[1])
    g, be = make_bn(layers[1])
    params["stem"] = (w, b, g, be)
    mid = layers[1]
    params["res"] = []
    for _ in range(n_res_blocks):
        w1, b1 = make_linear(next(keys), mid, mid)
        g1, be1 = make_bn(mid)
        w2, b2 = make_linear(next(keys), mid, mid)
        g2, be2 = make_bn(mid)
        params["res"].append((w1, b1, g1, be1, w2, b2, g2, be2))
    params["mid"] = []
    for i in range(1, len(layers) - 2):
        w, b = make_linear(next(keys), layers[i], layers[i + 1])
        g, be = make_bn(layers[i + 1])
        params["mid"].append((w, b, g, be))
    params["head"] = make_linear(next(keys), layers[-2], layers[-1])
    return params


def _pad1(v, pad, fill=0.0):
    out = jnp.full((pad,), fill, jnp.float32)
    return out.at[:v.shape[0]].set(v)


def _collect_stages(params):
    stages = [params["stem"]]
    for (w1, b1, g1, be1, w2, b2, g2, be2) in params["res"]:
        stages.append((w1, b1, g1, be1))
        stages.append((w2, b2, g2, be2))
    stages.extend(params["mid"])
    return stages


def pack_params(params, *, hidden, pad=PAD, weight_dtype=WEIGHT_DTYPE):
    stages = _collect_stages(params)
    kc = _round_up(hidden, 8)

    def pack_w(w, rows):
        # torch layout (out, in) -> pre-transposed (in, out), zero-padded to (rows, pad),
        # stored in bf16 (cast back to f32 in-kernel before the dot).
        m = jnp.zeros((rows, pad), jnp.float32)
        return m.at[:w.shape[1], :w.shape[0]].set(w.T).astype(weight_dtype)

    w0 = stages[0][0]
    ws = pack_w(w0, w0.shape[1])                                        # (d_in, pad)
    wst = jnp.stack([pack_w(w, kc) for (w, _b, _g, _be) in stages[1:]])  # (n_stages-1, kc, pad)
    # Pre-BN Linear biases are intentionally dropped (they cancel exactly in train-mode BN).
    g_all = jnp.stack([_pad1(g, pad, 1.0) for (_w, _b, g, _be) in stages])   # gamma pad inert
    b_all = jnp.stack([_pad1(be, pad, 0.0) for (_w, _b, _g, be) in stages])  # beta pad must be 0
    wh, bh = params["head"]
    whp = pack_w(wh, kc)                                                 # (kc, pad)
    bhp = _pad1(bh, pad, 0.0).reshape(1, pad)
    return ws, wst, g_all, b_all, whp, bhp


def _quantize_weights(params, dtype=WEIGHT_DTYPE):
    """Reference params with the same bf16-rounded weights the kernel uses."""
    q = lambda w: w.astype(dtype).astype(jnp.float32)
    out = {}
    w, b, g, be = params["stem"]
    out["stem"] = (q(w), b, g, be)
    out["res"] = [(q(w1), b1, g1, be1, q(w2), b2, g2, be2)
                  for (w1, b1, g1, be1, w2, b2, g2, be2) in params["res"]]
    out["mid"] = [(q(w), b, g, be) for (w, b, g, be) in params["mid"]]
    wh, bh = params["head"]
    out["head"] = (q(wh), bh)
    return out


# ------------------------------- pure-JAX reference ----------------------------

def _ref_forward(x, params):
    def gelu(v):
        return 0.5 * v * (1.0 + jax.lax.erf(v / jnp.sqrt(2.0)))

    def bn(v, g, be):
        m = jnp.mean(v, axis=0, keepdims=True)
        var = jnp.mean((v - m) ** 2, axis=0, keepdims=True)
        return (v - m) * jax.lax.rsqrt(var + EPS) * g + be

    w, b, g, be = params["stem"]
    h = gelu(bn(x @ w.T + b, g, be))
    for (w1, b1, g1, be1, w2, b2, g2, be2) in params["res"]:
        t = gelu(bn(h @ w1.T + b1, g1, be1))
        t = bn(t @ w2.T + b2, g2, be2)
        h = gelu(h + t)
    for (w, b, g, be) in params["mid"]:
        h = gelu(bn(h @ w.T + b, g, be))
    w, b = params["head"]
    return h @ w.T + b


# ----------------------------------- main --------------------------------------

if __name__ == "__main__":
    key = jax.random.PRNGKey(0)
    k_param, k_x = jax.random.split(key)

    # ImprovedDNN(layers=[16, 32, 32, 8], n_res_blocks=3), batch = 16
    layers = [16, 32, 32, 8]
    n_res_blocks = 3
    batch = 16

    params = init_improved_dnn(k_param, layers, n_res_blocks=n_res_blocks)
    packed = pack_params(params, hidden=layers[1])
    n_mid = len(params["mid"])

    x = jax.random.normal(k_x, (batch, layers[0]), jnp.float32)

    fwd = jax.jit(functools.partial(
        improved_dnn_forward,
        out_dim=layers[-1],
        n_res_blocks=n_res_blocks,
        n_mid=n_mid,
        hidden=layers[1],
    ))
    out = jax.block_until_ready(fwd(x, packed))
    assert out.shape == (batch, layers[-1])

    # Kernel correctness: compare against a reference that uses the identical
    # bf16-rounded weights (isolates kernel math from the storage-dtype choice).
    ref_matched = _ref_forward(x, _quantize_weights(params))
    assert jnp.allclose(out, ref_matched, atol=1e-4, rtol=1e-4), \
        "mismatch vs bf16-weight-matched pure-JAX reference"

    # Semantics sanity: bf16 weight storage introduces only a small deviation from the
    # exact f32 module forward.
    ref_exact = _ref_forward(x, params)
    assert jnp.allclose(out, ref_exact, atol=1e-1, rtol=1e-1), \
        "bf16-weight deviation vs exact f32 reference unexpectedly large"

    # TODO(synk): BatchNorm running-stat updates (eval mode) are not modeled; the kernel
    # uses training-mode batch statistics, matching the freshly constructed module.
    # TODO(synk): cross-call weight prefetch (SEMAPHORE/VMEM-ref futures) not implemented;
    # amortize the per-call weight DMA by batching more rows per call instead.
    print("KERNEL_OK")
</pallas_src>

<mosaic_0001>
module attributes {stable_mosaic.version = 11 : i64} {
  func.func @kernel(%arg0: memref<16x16xf32, #tpu.memory_space<vmem>>, %arg1: memref<16x128xbf16, #tpu.memory_space<vmem>>, %arg2: memref<7x32x128xbf16, #tpu.memory_space<vmem>>, %arg3: memref<8x128xf32, #tpu.memory_space<vmem>>, %arg4: memref<8x128xf32, #tpu.memory_space<vmem>>, %arg5: memref<32x128xbf16, #tpu.memory_space<vmem>>, %arg6: memref<1x128xf32, #tpu.memory_space<vmem>>, %arg7: memref<16x128xf32, #tpu.memory_space<vmem>>) attributes {dimension_semantics = [], scalar_prefetch = 0 : i64, scratch_operands = 0 : i64, tpu.core_type = #tpu.core_type<tc>} {
    %c0 = arith.constant 0 : index
    %c0_0 = arith.constant 0 : index
    %0 = vector.load %arg1[%c0, %c0_0] : memref<16x128xbf16, #tpu.memory_space<vmem>>, vector<16x128xbf16>
    %1 = arith.extf %0 : vector<16x128xbf16> to vector<16x128xf32>
    %c0_1 = arith.constant 0 : index
    %c0_2 = arith.constant 0 : index
    %2 = vector.load %arg0[%c0_1, %c0_2] : memref<16x16xf32, #tpu.memory_space<vmem>>, vector<16x16xf32>
    %cst = arith.constant dense<0.000000e+00> : vector<16x128xf32>
    %3 = tpu.matmul %2, %1, %cst {dimension_numbers = #tpu.dot_dimension_numbers<[1], [0], [0], [1], [0, 0, 1, 1], [], []>} : vector<16x16xf32>, vector<16x128xf32>, vector<16x128xf32> -> vector<16x128xf32>
    %cst_3 = arith.constant dense<0.000000e+00> : vector<128xf32>
    %4 = vector.multi_reduction <add>, %3, %cst_3 [0] : vector<16x128xf32> to vector<128xf32>
    %5 = vector.shape_cast %4 : vector<128xf32> to vector<1x128xf32>
    %cst_4 = arith.constant 1.600000e+01 : f32
    %6 = vector.broadcast %cst_4 : f32 to vector<1x128xf32>
    %7 = arith.divf %5, %6 : vector<1x128xf32>
    %8 = vector.broadcast %7 : vector<1x128xf32> to vector<16x128xf32>
    %9 = arith.subf %3, %8 : vector<16x128xf32>
    %10 = vector.broadcast %7 : vector<1x128xf32> to vector<16x128xf32>
    %11 = arith.subf %3, %10 : vector<16x128xf32>
    %12 = arith.mulf %9, %11 : vector<16x128xf32>
    %cst_5 = arith.constant dense<0.000000e+00> : vector<128xf32>
    %13 = vector.multi_reduction <add>, %12, %cst_5 [0] : vector<16x128xf32> to vector<128xf32>
    %14 = vector.shape_cast %13 : vector<128xf32> to vector<1x128xf32>
    %cst_6 = arith.constant 1.600000e+01 : f32
    %15 = vector.broadcast %cst_6 : f32 to vector<1x128xf32>
    %16 = arith.divf %14, %15 : vector<1x128xf32>
    %17 = vector.broadcast %7 : vector<1x128xf32> to vector<16x128xf32>
    %18 = arith.subf %3, %17 : vector<16x128xf32>
    %cst_7 = arith.constant 9.99999974E-6 : f32
    %19 = vector.broadcast %cst_7 : f32 to vector<1x128xf32>
    %20 = arith.addf %16, %19 : vector<1x128xf32>
    %21 = math.rsqrt %20 : vector<1x128xf32>
    %22 = vector.broadcast %21 : vector<1x128xf32> to vector<16x128xf32>
    %23 = arith.mulf %18, %22 : vector<16x128xf32>
    %c0_8 = arith.constant 0 : index
    %c0_9 = arith.constant 0 : index
    %24 = vector.load %arg3[%c0_8, %c0_9] : memref<8x128xf32, #tpu.memory_space<vmem>>, vector<1x128xf32>
    %25 = vector.broadcast %24 : vector<1x128xf32> to vector<16x128xf32>
    %26 = arith.mulf %23, %25 : vector<16x128xf32>
    %c0_10 = arith.constant 0 : index
    %c0_11 = arith.constant 0 : index
    %27 = vector.load %arg4[%c0_10, %c0_11] : memref<8x128xf32, #tpu.memory_space<vmem>>, vector<1x128xf32>
    %28 = vector.broadcast %27 : vector<1x128xf32> to vector<16x128xf32>
    %29 = arith.addf %26, %28 : vector<16x128xf32>
    %cst_12 = arith.constant 5.000000e-01 : f32
    %30 = vector.broadcast %cst_12 : f32 to vector<16x128xf32>
    %31 = arith.mulf %30, %29 : vector<16x128xf32>
    %cst_13 = arith.constant 0.707106769 : f32
    %32 = vector.broadcast %cst_13 : f32 to vector<16x128xf32>
    %33 = arith.mulf %29, %32 : vector<16x128xf32>
    %34 = math.erf %33 : vector<16x128xf32>
    %cst_14 = arith.constant 1.000000e+00 : f32
    %35 = vector.broadcast %cst_14 : f32 to vector<16x128xf32>
    %36 = arith.addf %35, %34 : vector<16x128xf32>
    %37 = arith.mulf %31, %36 : vector<16x128xf32>
    %c0_15 = arith.constant 0 : index
    %c0_16 = arith.constant 0 : index
    %c0_17 = arith.constant 0 : index
    %38 = vector.load %arg2[%c0_15, %c0_16, %c0_17] : memref<7x32x128xbf16, #tpu.memory_space<vmem>>, vector<1x32x128xbf16>
    %39 = vector.shape_cast %38 : vector<1x32x128xbf16> to vector<32x128xbf16>
    %40 = arith.extf %39 : vector<32x128xbf16> to vector<32x128xf32>
    %41 = vector.extract_strided_slice %37 {offsets = [0, 0], sizes = [16, 32], strides = [1, 1]} : vector<16x128xf32> to vector<16x32xf32>
    %cst_18 = arith.constant dense<0.000000e+00> : vector<16x128xf32>
    %42 = tpu.matmul %41, %40, %cst_18 {dimension_numbers = #tpu.dot_dimension_numbers<[1], [0], [0], [1], [0, 0, 1, 1], [], []>} : vector<16x32xf32>, vector<32x128xf32>, vector<16x128xf32> -> vector<16x128xf32>
    %cst_19 = arith.constant dense<0.000000e+00> : vector<128xf32>
    %43 = vector.multi_reduction <add>, %42, %cst_19 [0] : vector<16x128xf32> to vector<128xf32>
    %44 = vector.shape_cast %43 : vector<128xf32> to vector<1x128xf32>
    %cst_20 = arith.constant 1.600000e+01 : f32
    %45 = vector.broadcast %cst_20 : f32 to vector<1x128xf32>
    %46 = arith.divf %44, %45 : vector<1x128xf32>
    %47 = vector.broadcast %46 : vector<1x128xf32> to vector<16x128xf32>
    %48 = arith.subf %42, %47 : vector<16x128xf32>
    %49 = vector.broadcast %46 : vector<1x128xf32> to vector<16x128xf32>
    %50 = arith.subf %42, %49 : vector<16x128xf32>
    %51 = arith.mulf %48, %50 : vector<16x128xf32>
    %cst_21 = arith.constant dense<0.000000e+00> : vector<128xf32>
    %52 = vector.multi_reduction <add>, %51, %cst_21 [0] : vector<16x128xf32> to vector<128xf32>
    %53 = vector.shape_cast %52 : vector<128xf32> to vector<1x128xf32>
    %cst_22 = arith.constant 1.600000e+01 : f32
    %54 = vector.broadcast %cst_22 : f32 to vector<1x128xf32>
    %55 = arith.divf %53, %54 : vector<1x128xf32>
    %56 = vector.broadcast %46 : vector<1x128xf32> to vector<16x128xf32>
    %57 = arith.subf %42, %56 : vector<16x128xf32>
    %cst_23 = arith.constant 9.99999974E-6 : f32
    %58 = vector.broadcast %cst_23 : f32 to vector<1x128xf32>
    %59 = arith.addf %55, %58 : vector<1x128xf32>
    %60 = math.rsqrt %59 : vector<1x128xf32>
    %61 = vector.broadcast %60 : vector<1x128xf32> to vector<16x128xf32>
    %62 = arith.mulf %57, %61 : vector<16x128xf32>
    %c1 = arith.constant 1 : index
    %c0_24 = arith.constant 0 : index
    %63 = vector.load %arg3[%c1, %c0_24] : memref<8x128xf32, #tpu.memory_space<vmem>>, vector<1x128xf32>
    %64 = vector.broadcast %63 : vector<1x128xf32> to vector<16x128xf32>
    %65 = arith.mulf %62, %64 : vector<16x128xf32>
    %c1_25 = arith.constant 1 : index
    %c0_26 = arith.constant 0 : index
    %66 = vector.load %arg4[%c1_25, %c0_26] : memref<8x128xf32, #tpu.memory_space<vmem>>, vector<1x128xf32>
    %67 = vector.broadcast %66 : vector<1x128xf32> to vector<16x128xf32>
    %68 = arith.addf %65, %67 : vector<16x128xf32>
    %cst_27 = arith.constant 5.000000e-01 : f32
    %69 = vector.broadcast %cst_27 : f32 to vector<16x128xf32>
    %70 = arith.mulf %69, %68 : vector<16x128xf32>
    %cst_28 = arith.constant 0.707106769 : f32
    %71 = vector.broadcast %cst_28 : f32 to vector<16x128xf32>
    %72 = arith.mulf %68, %71 : vector<16x128xf32>
    %73 = math.erf %72 : vector<16x128xf32>
    %cst_29 = arith.constant 1.000000e+00 : f32
    %74 = vector.broadcast %cst_29 : f32 to vector<16x128xf32>
    %75 = arith.addf %74, %73 : vector<16x128xf32>
    %76 = arith.mulf %70, %75 : vector<16x128xf32>
    %c1_30 = arith.constant 1 : index
    %c0_31 = arith.constant 0 : index
    %c0_32 = arith.constant 0 : index
    %77 = vector.load %arg2[%c1_30, %c0_31, %c0_32] : memref<7x32x128xbf16, #tpu.memory_space<vmem>>, vector<1x32x128xbf16>
    %78 = vector.shape_cast %77 : vector<1x32x128xbf16> to vector<32x128xbf16>
    %79 = arith.extf %78 : vector<32x128xbf16> to vector<32x128xf32>
    %80 = vector.extract_strided_slice %76 {offsets = [0, 0], sizes = [16, 32], strides = [1, 1]} : vector<16x128xf32> to vector<16x32xf32>
    %cst_33 = arith.constant dense<0.000000e+00> : vector<16x128xf32>
    %81 = tpu.matmul %80, %79, %cst_33 {dimension_numbers = #tpu.dot_dimension_numbers<[1], [0], [0], [1], [0, 0, 1, 1], [], []>} : vector<16x32xf32>, vector<32x128xf32>, vector<16x128xf32> -> vector<16x128xf32>
    %cst_34 = arith.constant dense<0.000000e+00> : vector<128xf32>
    %82 = vector.multi_reduction <add>, %81, %cst_34 [0] : vector<16x128xf32> to vector<128xf32>
    %83 = vector.shape_cast %82 : vector<128xf32> to vector<1x128xf32>
    %cst_35 = arith.constant 1.600000e+01 : f32
    %84 = vector.broadcast %cst_35 : f32 to vector<1x128xf32>
    %85 = arith.divf %83, %84 : vector<1x128xf32>
    %86 = vector.broadcast %85 : vector<1x128xf32> to vector<16x128xf32>
    %87 = arith.subf %81, %86 : vector<16x128xf32>
    %88 = vector.broadcast %85 : vector<1x128xf32> to vector<16x128xf32>
    %89 = arith.subf %81, %88 : vector<16x128xf32>
    %90 = arith.mulf %87, %89 : vector<16x128xf32>
    %cst_36 = arith.constant dense<0.000000e+00> : vector<128xf32>
    %91 = vector.multi_reduction <add>, %90, %cst_36 [0] : vector<16x128xf32> to vector<128xf32>
    %92 = vector.shape_cast %91 : vector<128xf32> to vector<1x128xf32>
    %cst_37 = arith.constant 1.600000e+01 : f32
    %93 = vector.broadcast %cst_37 : f32 to vector<1x128xf32>
    %94 = arith.divf %92, %93 : vector<1x128xf32>
    %95 = vector.broadcast %85 : vector<1x128xf32> to vector<16x128xf32>
    %96 = arith.subf %81, %95 : vector<16x128xf32>
    %cst_38 = arith.constant 9.99999974E-6 : f32
    %97 = vector.broadcast %cst_38 : f32 to vector<1x128xf32>
    %98 = arith.addf %94, %97 : vector<1x128xf32>
    %99 = math.rsqrt %98 : vector<1x128xf32>
    %100 = vector.broadcast %99 : vector<1x128xf32> to vector<16x128xf32>
    %101 = arith.mulf %96, %100 : vector<16x128xf32>
    %c2 = arith.constant 2 : index
    %c0_39 = arith.constant 0 : index
    %102 = vector.load %arg3[%c2, %c0_39] : memref<8x128xf32, #tpu.memory_space<vmem>>, vector<1x128xf32>
    %103 = vector.broadcast %102 : vector<1x128xf32> to vector<16x128xf32>
    %104 = arith.mulf %101, %103 : vector<16x128xf32>
    %c2_40 = arith.constant 2 : index
    %c0_41 = arith.constant 0 : index
    %105 = vector.load %arg4[%c2_40, %c0_41] : memref<8x128xf32, #tpu.memory_space<vmem>>, vector<1x128xf32>
    %106 = vector.broadcast %105 : vector<1x128xf32> to vector<16x128xf32>
    %107 = arith.addf %104, %106 : vector<16x128xf32>
    %108 = arith.addf %37, %107 : vector<16x128xf32>
    %cst_42 = arith.constant 5.000000e-01 : f32
    %109 = vector.broadcast %cst_42 : f32 to vector<16x128xf32>
    %110 = arith.mulf %109, %108 : vector<16x128xf32>
    %cst_43 = arith.constant 0.707106769 : f32
    %111 = vector.broadcast %cst_43 : f32 to vector<16x128xf32>
    %112 = arith.mulf %108, %111 : vector<16x128xf32>
    %113 = math.erf %112 : vector<16x128xf32>
    %cst_44 = arith.constant 1.000000e+00 : f32
    %114 = vector.broadcast %cst_44 : f32 to vector<16x128xf32>
    %115 = arith.addf %114, %113 : vector<16x128xf32>
    %116 = arith.mulf %110, %115 : vector<16x128xf32>
    %c2_45 = arith.constant 2 : index
    %c0_46 = arith.constant 0 : index
    %c0_47 = arith.constant 0 : index
    %117 = vector.load %arg2[%c2_45, %c0_46, %c0_47] : memref<7x32x128xbf16, #tpu.memory_space<vmem>>, vector<1x32x128xbf16>
    %118 = vector.shape_cast %117 : vector<1x32x128xbf16> to vector<32x128xbf16>
    %119 = arith.extf %118 : vector<32x128xbf16> to vector<32x128xf32>
    %120 = vector.extract_strided_slice %116 {offsets = [0, 0], sizes = [16, 32], strides = [1, 1]} : vector<16x128xf32> to vector<16x32xf32>
    %cst_48 = arith.constant dense<0.000000e+00> : vector<16x128xf32>
    %121 = tpu.matmul %120, %119, %cst_48 {dimension_numbers = #tpu.dot_dimension_numbers<[1], [0], [0], [1], [0, 0, 1, 1], [], []>} : vector<16x32xf32>, vector<32x128xf32>, vector<16x128xf32> -> vector<16x128xf32>
    %cst_49 = arith.constant dense<0.000000e+00> : vector<128xf32>
    %122 = vector.multi_reduction <add>, %121, %cst_49 [0] : vector<16x128xf32> to vector<128xf32>
    %123 = vector.shape_cast %122 : vector<128xf32> to vector<1x128xf32>
    %cst_50 = arith.constant 1.600000e+01 : f32
    %124 = vector.broadcast %cst_50 : f32 to vector<1x128xf32>
    %125 = arith.divf %123, %124 : vector<1x128xf32>
    %126 = vector.broadcast %125 : vector<1x128xf32> to vector<16x128xf32>
    %127 = arith.subf %121, %126 : vector<16x128xf32>
    %128 = vector.broadcast %125 : vector<1x128xf32> to vector<16x128xf32>
    %129 = arith.subf %121, %128 : vector<16x128xf32>
    %130 = arith.mulf %127, %129 : vector<16x128xf32>
    %cst_51 = arith.constant dense<0.000000e+00> : vector<128xf32>
    %131 = vector.multi_reduction <add>, %130, %cst_51 [0] : vector<16x128xf32> to vector<128xf32>
    %132 = vector.shape_cast %131 : vector<128xf32> to vector<1x128xf32>
    %cst_52 = arith.constant 1.600000e+01 : f32
    %133 = vector.broadcast %cst_52 : f32 to vector<1x128xf32>
    %134 = arith.divf %132, %133 : vector<1x128xf32>
    %135 = vector.broadcast %125 : vector<1x128xf32> to vector<16x128xf32>
    %136 = arith.subf %121, %135 : vector<16x128xf32>
    %cst_53 = arith.constant 9.99999974E-6 : f32
    %137 = vector.broadcast %cst_53 : f32 to vector<1x128xf32>
    %138 = arith.addf %134, %137 : vector<1x128xf32>
    %139 = math.rsqrt %138 : vector<1x128xf32>
    %140 = vector.broadcast %139 : vector<1x128xf32> to vector<16x128xf32>
    %141 = arith.mulf %136, %140 : vector<16x128xf32>
    %c3 = arith.constant 3 : index
    %c0_54 = arith.constant 0 : index
    %142 = vector.load %arg3[%c3, %c0_54] : memref<8x128xf32, #tpu.memory_space<vmem>>, vector<1x128xf32>
    %143 = vector.broadcast %142 : vector<1x128xf32> to vector<16x128xf32>
    %144 = arith.mulf %141, %143 : vector<16x128xf32>
    %c3_55 = arith.constant 3 : index
    %c0_56 = arith.constant 0 : index
    %145 = vector.load %arg4[%c3_55, %c0_56] : memref<8x128xf32, #tpu.memory_space<vmem>>, vector<1x128xf32>
    %146 = vector.broadcast %145 : vector<1x128xf32> to vector<16x128xf32>
    %147 = arith.addf %144, %146 : vector<16x128xf32>
    %cst_57 = arith.constant 5.000000e-01 : f32
    %148 = vector.broadcast %cst_57 : f32 to vector<16x128xf32>
    %149 = arith.mulf %148, %147 : vector<16x128xf32>
    %cst_58 = arith.constant 0.707106769 : f32
    %150 = vector.broadcast %cst_58 : f32 to vector<16x128xf32>
    %151 = arith.mulf %147, %150 : vector<16x128xf32>
    %152 = math.erf %151 : vector<16x128xf32>
    %cst_59 = arith.constant 1.000000e+00 : f32
    %153 = vector.broadcast %cst_59 : f32 to vector<16x128xf32>
    %154 = arith.addf %153, %152 : vector<16x128xf32>
    %155 = arith.mulf %149, %154 : vector<16x128xf32>
    %c3_60 = arith.constant 3 : index
    %c0_61 = arith.constant 0 : index
    %c0_62 = arith.constant 0 : index
    %156 = vector.load %arg2[%c3_60, %c0_61, %c0_62] : memref<7x32x128xbf16, #tpu.memory_space<vmem>>, vector<1x32x128xbf16>
    %157 = vector.shape_cast %156 : vector<1x32x128xbf16> to vector<32x128xbf16>
    %158 = arith.extf %157 : vector<32x128xbf16> to vector<32x128xf32>
    %159 = vector.extract_strided_slice %155 {offsets = [0, 0], sizes = [16, 32], strides = [1, 1]} : vector<16x128xf32> to vector<16x32xf32>
    %cst_63 = arith.constant dense<0.000000e+00> : vector<16x128xf32>
    %160 = tpu.matmul %159, %158, %cst_63 {dimension_numbers = #tpu.dot_dimension_numbers<[1], [0], [0], [1], [0, 0, 1, 1], [], []>} : vector<16x32xf32>, vector<32x128xf32>, vector<16x128xf32> -> vector<16x128xf32>
    %cst_64 = arith.constant dense<0.000000e+00> : vector<128xf32>
    %161 = vector.multi_reduction <add>, %160, %cst_64 [0] : vector<16x128xf32> to vector<128xf32>
    %162 = vector.shape_cast %161 : vector<128xf32> to vector<1x128xf32>
    %cst_65 = arith.constant 1.600000e+01 : f32
    %163 = vector.broadcast %cst_65 : f32 to vector<1x128xf32>
    %164 = arith.divf %162, %163 : vector<1x128xf32>
    %165 = vector.broadcast %164 : vector<1x128xf32> to vector<16x128xf32>
    %166 = arith.subf %160, %165 : vector<16x128xf32>
    %167 = vector.broadcast %164 : vector<1x128xf32> to vector<16x128xf32>
    %168 = arith.subf %160, %167 : vector<16x128xf32>
    %169 = arith.mulf %166, %168 : vector<16x128xf32>
    %cst_66 = arith.constant dense<0.000000e+00> : vector<128xf32>
    %170 = vector.multi_reduction <add>, %169, %cst_66 [0] : vector<16x128xf32> to vector<128xf32>
    %171 = vector.shape_cast %170 : vector<128xf32> to vector<1x128xf32>
    %cst_67 = arith.constant 1.600000e+01 : f32
    %172 = vector.broadcast %cst_67 : f32 to vector<1x128xf32>
    %173 = arith.divf %171, %172 : vector<1x128xf32>
    %174 = vector.broadcast %164 : vector<1x128xf32> to vector<16x128xf32>
    %175 = arith.subf %160, %174 : vector<16x128xf32>
    %cst_68 = arith.constant 9.99999974E-6 : f32
    %176 = vector.broadcast %cst_68 : f32 to vector<1x128xf32>
    %177 = arith.addf %173, %176 : vector<1x128xf32>
    %178 = math.rsqrt %177 : vector<1x128xf32>
    %179 = vector.broadcast %178 : vector<1x128xf32> to vector<16x128xf32>
    %180 = arith.mulf %175, %179 : vector<16x128xf32>
    %c4 = arith.constant 4 : index
    %c0_69 = arith.constant 0 : index
    %181 = vector.load %arg3[%c4, %c0_69] : memref<8x128xf32, #tpu.memory_space<vmem>>, vector<1x128xf32>
    %182 = vector.broadcast %181 : vector<1x128xf32> to vector<16x128xf32>
    %183 = arith.mulf %180, %182 : vector<16x128xf32>
    %c4_70 = arith.constant 4 : index
    %c0_71 = arith.constant 0 : index
    %184 = vector.load %arg4[%c4_70, %c0_71] : memref<8x128xf32, #tpu.memory_space<vmem>>, vector<1x128xf32>
    %185 = vector.broadcast %184 : vector<1x128xf32> to vector<16x128xf32>
    %186 = arith.addf %183, %185 : vector<16x128xf32>
    %187 = arith.addf %116, %186 : vector<16x128xf32>
    %cst_72 = arith.constant 5.000000e-01 : f32
    %188 = vector.broadcast %cst_72 : f32 to vector<16x128xf32>
    %189 = arith.mulf %188, %187 : vector<16x128xf32>
    %cst_73 = arith.constant 0.707106769 : f32
    %190 = vector.broadcast %cst_73 : f32 to vector<16x128xf32>
    %191 = arith.mulf %187, %190 : vector<16x128xf32>
    %192 = math.erf %191 : vector<16x128xf32>
    %cst_74 = arith.constant 1.000000e+00 : f32
    %193 = vector.broadcast %cst_74 : f32 to vector<16x128xf32>
    %194 = arith.addf %193, %192 : vector<16x128xf32>
    %195 = arith.mulf %189, %194 : vector<16x128xf32>
    %c4_75 = arith.constant 4 : index
    %c0_76 = arith.constant 0 : index
    %c0_77 = arith.constant 0 : index
    %196 = vector.load %arg2[%c4_75, %c0_76, %c0_77] : memref<7x32x128xbf16, #tpu.memory_space<vmem>>, vector<1x32x128xbf16>
    %197 = vector.shape_cast %196 : vector<1x32x128xbf16> to vector<32x128xbf16>
    %198 = arith.extf %197 : vector<32x128xbf16> to vector<32x128xf32>
    %199 = vector.extract_strided_slice %195 {offsets = [0, 0], sizes = [16, 32], strides = [1, 1]} : vector<16x128xf32> to vector<16x32xf32>
    %cst_78 = arith.constant dense<0.000000e+00> : vector<16x128xf32>
    %200 = tpu.matmul %199, %198, %cst_78 {dimension_numbers = #tpu.dot_dimension_numbers<[1], [0], [0], [1], [0, 0, 1, 1], [], []>} : vector<16x32xf32>, vector<32x128xf32>, vector<16x128xf32> -> vector<16x128xf32>
    %cst_79 = arith.constant dense<0.000000e+00> : vector<128xf32>
    %201 = vector.multi_reduction <add>, %200, %cst_79 [0] : vector<16x128xf32> to vector<128xf32>
    %202 = vector.shape_cast %201 : vector<128xf32> to vector<1x128xf32>
    %cst_80 = arith.constant 1.600000e+01 : f32
    %203 = vector.broadcast %cst_80 : f32 to vector<1x128xf32>
    %204 = arith.divf %202, %203 : vector<1x128xf32>
    %205 = vector.broadcast %204 : vector<1x128xf32> to vector<16x128xf32>
    %206 = arith.subf %200, %205 : vector<16x128xf32>
    %207 = vector.broadcast %204 : vector<1x128xf32> to vector<16x128xf32>
    %208 = arith.subf %200, %207 : vector<16x128xf32>
    %209 = arith.mulf %206, %208 : vector<16x128xf32>
    %cst_81 = arith.constant dense<0.000000e+00> : vector<128xf32>
    %210 = vector.multi_reduction <add>, %209, %cst_81 [0] : vector<16x128xf32> to vector<128xf32>
    %211 = vector.shape_cast %210 : vector<128xf32> to vector<1x128xf32>
    %cst_82 = arith.constant 1.600000e+01 : f32
    %212 = vector.broadcast %cst_82 : f32 to vector<1x128xf32>
    %213 = arith.divf %211, %212 : vector<1x128xf32>
    %214 = vector.broadcast %204 : vector<1x128xf32> to vector<16x128xf32>
    %215 = arith.subf %200, %214 : vector<16x128xf32>
    %cst_83 = arith.constant 9.99999974E-6 : f32
    %216 = vector.broadcast %cst_83 : f32 to vector<1x128xf32>
    %217 = arith.addf %213, %216 : vector<1x128xf32>
    %218 = math.rsqrt %217 : vector<1x128xf32>
    %219 = vector.broadcast %218 : vector<1x128xf32> to vector<16x128xf32>
    %220 = arith.mulf %215, %219 : vector<16x128xf32>
    %c5 = arith.constant 5 : index
    %c0_84 = arith.constant 0 : index
    %221 = vector.load %arg3[%c5, %c0_84] : memref<8x128xf32, #tpu.memory_space<vmem>>, vector<1x128xf32>
    %222 = vector.broadcast %221 : vector<1x128xf32> to vector<16x128xf32>
    %223 = arith.mulf %220, %222 : vector<16x128xf32>
    %c5_85 = arith.constant 5 : index
    %c0_86 = arith.constant 0 : index
    %224 = vector.load %arg4[%c5_85, %c0_86] : memref<8x128xf32, #tpu.memory_space<vmem>>, vector<1x128xf32>
    %225 = vector.broadcast %224 : vector<1x128xf32> to vector<16x128xf32>
    %226 = arith.addf %223, %225 : vector<16x128xf32>
    %cst_87 = arith.constant 5.000000e-01 : f32
    %227 = vector.broadcast %cst_87 : f32 to vector<16x128xf32>
    %228 = arith.mulf %227, %226 : vector<16x128xf32>
    %cst_88 = arith.constant 0.707106769 : f32
    %229 = vector.broadcast %cst_88 : f32 to vector<16x128xf32>
    %230 = arith.mulf %226, %229 : vector<16x128xf32>
    %231 = math.erf %230 : vector<16x128xf32>
    %cst_89 = arith.constant 1.000000e+00 : f32
    %232 = vector.broadcast %cst_89 : f32 to vector<16x128xf32>
    %233 = arith.addf %232, %231 : vector<16x128xf32>
    %234 = arith.mulf %228, %233 : vector<16x128xf32>
    %c5_90 = arith.constant 5 : index
    %c0_91 = arith.constant 0 : index
    %c0_92 = arith.constant 0 : index
    %235 = vector.load %arg2[%c5_90, %c0_91, %c0_92] : memref<7x32x128xbf16, #tpu.memory_space<vmem>>, vector<1x32x128xbf16>
    %236 = vector.shape_cast %235 : vector<1x32x128xbf16> to vector<32x128xbf16>
    %237 = arith.extf %236 : vector<32x128xbf16> to vector<32x128xf32>
    %238 = vector.extract_strided_slice %234 {offsets = [0, 0], sizes = [16, 32], strides = [1, 1]} : vector<16x128xf32> to vector<16x32xf32>
    %cst_93 = arith.constant dense<0.000000e+00> : vector<16x128xf32>
    %239 = tpu.matmul %238, %237, %cst_93 {dimension_numbers = #tpu.dot_dimension_numbers<[1], [0], [0], [1], [0, 0, 1, 1], [], []>} : vector<16x32xf32>, vector<32x128xf32>, vector<16x128xf32> -> vector<16x128xf32>
    %cst_94 = arith.constant dense<0.000000e+00> : vector<128xf32>
    %240 = vector.multi_reduction <add>, %239, %cst_94 [0] : vector<16x128xf32> to vector<128xf32>
    %241 = vector.shape_cast %240 : vector<128xf32> to vector<1x128xf32>
    %cst_95 = arith.constant 1.600000e+01 : f32
    %242 = vector.broadcast %cst_95 : f32 to vector<1x128xf32>
    %243 = arith.divf %241, %242 : vector<1x128xf32>
    %244 = vector.broadcast %243 : vector<1x128xf32> to vector<16x128xf32>
    %245 = arith.subf %239, %244 : vector<16x128xf32>
    %246 = vector.broadcast %243 : vector<1x128xf32> to vector<16x128xf32>
    %247 = arith.subf %239, %246 : vector<16x128xf32>
    %248 = arith.mulf %245, %247 : vector<16x128xf32>
    %cst_96 = arith.constant dense<0.000000e+00> : vector<128xf32>
    %249 = vector.multi_reduction <add>, %248, %cst_96 [0] : vector<16x128xf32> to vector<128xf32>
    %250 = vector.shape_cast %249 : vector<128xf32> to vector<1x128xf32>
    %cst_97 = arith.constant 1.600000e+01 : f32
    %251 = vector.broadcast %cst_97 : f32 to vector<1x128xf32>
    %252 = arith.divf %250, %251 : vector<1x128xf32>
    %253 = vector.broadcast %243 : vector<1x128xf32> to vector<16x128xf32>
    %254 = arith.subf %239, %253 : vector<16x128xf32>
    %cst_98 = arith.constant 9.99999974E-6 : f32
    %255 = vector.broadcast %cst_98 : f32 to vector<1x128xf32>
    %256 = arith.addf %252, %255 : vector<1x128xf32>
    %257 = math.rsqrt %256 : vector<1x128xf32>
    %258 = vector.broadcast %257 : vector<1x128xf32> to vector<16x128xf32>
    %259 = arith.mulf %254, %258 : vector<16x128xf32>
    %c6 = arith.constant 6 : index
    %c0_99 = arith.constant 0 : index
    %260 = vector.load %arg3[%c6, %c0_99] : memref<8x128xf32, #tpu.memory_space<vmem>>, vector<1x128xf32>
    %261 = vector.broadcast %260 : vector<1x128xf32> to vector<16x128xf32>
    %262 = arith.mulf %259, %261 : vector<16x128xf32>
    %c6_100 = arith.constant 6 : index
    %c0_101 = arith.constant 0 : index
    %263 = vector.load %arg4[%c6_100, %c0_101] : memref<8x128xf32, #tpu.memory_space<vmem>>, vector<1x128xf32>
    %264 = vector.broadcast %263 : vector<1x128xf32> to vector<16x128xf32>
    %265 = arith.addf %262, %264 : vector<16x128xf32>
    %266 = arith.addf %195, %265 : vector<16x128xf32>
    %cst_102 = arith.constant 5.000000e-01 : f32
    %267 = vector.broadcast %cst_102 : f32 to vector<16x128xf32>
    %268 = arith.mulf %267, %266 : vector<16x128xf32>
    %cst_103 = arith.constant 0.707106769 : f32
    %269 = vector.broadcast %cst_103 : f32 to vector<16x128xf32>
    %270 = arith.mulf %266, %269 : vector<16x128xf32>
    %271 = math.erf %270 : vector<16x128xf32>
    %cst_104 = arith.constant 1.000000e+00 : f32
    %272 = vector.broadcast %cst_104 : f32 to vector<16x128xf32>
    %273 = arith.addf %272, %271 : vector<16x128xf32>
    %274 = arith.mulf %268, %273 : vector<16x128xf32>
    %c6_105 = arith.constant 6 : index
    %c0_106 = arith.constant 0 : index
    %c0_107 = arith.constant 0 : index
    %275 = vector.load %arg2[%c6_105, %c0_106, %c0_107] : memref<7x32x128xbf16, #tpu.memory_space<vmem>>, vector<1x32x128xbf16>
    %276 = vector.shape_cast %275 : vector<1x32x128xbf16> to vector<32x128xbf16>
    %277 = arith.extf %276 : vector<32x128xbf16> to vector<32x128xf32>
    %278 = vector.extract_strided_slice %274 {offsets = [0, 0], sizes = [16, 32], strides = [1, 1]} : vector<16x128xf32> to vector<16x32xf32>
    %cst_108 = arith.constant dense<0.000000e+00> : vector<16x128xf32>
    %279 = tpu.matmul %278, %277, %cst_108 {dimension_numbers = #tpu.dot_dimension_numbers<[1], [0], [0], [1], [0, 0, 1, 1], [], []>} : vector<16x32xf32>, vector<32x128xf32>, vector<16x128xf32> -> vector<16x128xf32>
    %cst_109 = arith.constant dense<0.000000e+00> : vector<128xf32>
    %280 = vector.multi_reduction <add>, %279, %cst_109 [0] : vector<16x128xf32> to vector<128xf32>
    %281 = vector.shape_cast %280 : vector<128xf32> to vector<1x128xf32>
    %cst_110 = arith.constant 1.600000e+01 : f32
    %282 = vector.broadcast %cst_110 : f32 to vector<1x128xf32>
    %283 = arith.divf %281, %282 : vector<1x128xf32>
    %284 = vector.broadcast %283 : vector<1x128xf32> to vector<16x128xf32>
    %285 = arith.subf %279, %284 : vector<16x128xf32>
    %286 = vector.broadcast %283 : vector<1x128xf32> to vector<16x128xf32>
    %287 = arith.subf %279, %286 : vector<16x128xf32>
    %288 = arith.mulf %285, %287 : vector<16x128xf32>
    %cst_111 = arith.constant dense<0.000000e+00> : vector<128xf32>
    %289 = vector.multi_reduction <add>, %288, %cst_111 [0] : vector<16x128xf32> to vector<128xf32>
    %290 = vector.shape_cast %289 : vector<128xf32> to vector<1x128xf32>
    %cst_112 = arith.constant 1.600000e+01 : f32
    %291 = vector.broadcast %cst_112 : f32 to vector<1x128xf32>
    %292 = arith.divf %290, %291 : vector<1x128xf32>
    %293 = vector.broadcast %283 : vector<1x128xf32> to vector<16x128xf32>
    %294 = arith.subf %279, %293 : vector<16x128xf32>
    %cst_113 = arith.constant 9.99999974E-6 : f32
    %295 = vector.broadcast %cst_113 : f32 to vector<1x128xf32>
    %296 = arith.addf %292, %295 : vector<1x128xf32>
    %297 = math.rsqrt %296 : vector<1x128xf32>
    %298 = vector.broadcast %297 : vector<1x128xf32> to vector<16x128xf32>
    %299 = arith.mulf %294, %298 : vector<16x128xf32>
    %c7 = arith.constant 7 : index
    %c0_114 = arith.constant 0 : index
    %300 = vector.load %arg3[%c7, %c0_114] : memref<8x128xf32, #tpu.memory_space<vmem>>, vector<1x128xf32>
    %301 = vector.broadcast %300 : vector<1x128xf32> to vector<16x128xf32>
    %302 = arith.mulf %299, %301 : vector<16x128xf32>
    %c7_115 = arith.constant 7 : index
    %c0_116 = arith.constant 0 : index
    %303 = vector.load %arg4[%c7_115, %c0_116] : memref<8x128xf32, #tpu.memory_space<vmem>>, vector<1x128xf32>
    %304 = vector.broadcast %303 : vector<1x128xf32> to vector<16x128xf32>
    %305 = arith.addf %302, %304 : vector<16x128xf32>
    %cst_117 = arith.constant 5.000000e-01 : f32
    %306 = vector.broadcast %cst_117 : f32 to vector<16x128xf32>
    %307 = arith.mulf %306, %305 : vector<16x128xf32>
    %cst_118 = arith.constant 0.707106769 : f32
    %308 = vector.broadcast %cst_118 : f32 to vector<16x128xf32>
    %309 = arith.mulf %305, %308 : vector<16x128xf32>
    %310 = math.erf %309 : vector<16x128xf32>
    %cst_119 = arith.constant 1.000000e+00 : f32
    %311 = vector.broadcast %cst_119 : f32 to vector<16x128xf32>
    %312 = arith.addf %311, %310 : vector<16x128xf32>
    %313 = arith.mulf %307, %312 : vector<16x128xf32>
    %c0_120 = arith.constant 0 : index
    %c0_121 = arith.constant 0 : index
    %314 = vector.load %arg5[%c0_120, %c0_121] : memref<32x128xbf16, #tpu.memory_space<vmem>>, vector<32x128xbf16>
    %315 = arith.extf %314 : vector<32x128xbf16> to vector<32x128xf32>
    %316 = vector.extract_strided_slice %313 {offsets = [0, 0], sizes = [16, 32], strides = [1, 1]} : vector<16x128xf32> to vector<16x32xf32>
    %cst_122 = arith.constant dense<0.000000e+00> : vector<16x128xf32>
    %317 = tpu.matmul %316, %315, %cst_122 {dimension_numbers = #tpu.dot_dimension_numbers<[1], [0], [0], [1], [0, 0, 1, 1], [], []>} : vector<16x32xf32>, vector<32x128xf32>, vector<16x128xf32> -> vector<16x128xf32>
    %c0_123 = arith.constant 0 : index
    %c0_124 = arith.constant 0 : index
    %318 = vector.load %arg6[%c0_123, %c0_124] : memref<1x128xf32, #tpu.memory_space<vmem>>, vector<1x128xf32>
    %319 = vector.broadcast %318 : vector<1x128xf32> to vector<16x128xf32>
    %320 = arith.addf %317, %319 : vector<16x128xf32>
    %c0_125 = arith.constant 0 : index
    %c0_126 = arith.constant 0 : index
    %321 = vector.load %arg7[%c0_125, %c0_126] : memref<16x128xf32, #tpu.memory_space<vmem>>, vector<16x128xf32>
    tpu.vector_store %arg7[%c0_125, %c0_126], %320 {strides = array<i32>} : memref<16x128xf32, #tpu.memory_space<vmem>>, vector<16x128xf32>,
    return
  }
}

</mosaic_0001>

<llo_original>
// kernel: improved_dnn_forward.1
$region0: #{improved_dnn_forward.1}
  #allocation0 [shape = 'u32[]', space=smem, size = 0x4, offset = 0x4, fixed_abs, tag = 'smem constant byte address 0x4 - core index']
  #allocation1 [shape = 'u32[72,128]{1,0:T(1,128)}', space=vmem, size = 0x9000, scoped, tag = 'internal scratch']
  %s0 = inlined_call_operand.hbm [shape: f32[16,16], index: 0, kind: input, shape index: {}]
  %s1 = inlined_call_operand.hbm [shape: bf16[16,128], index: 1, kind: input, shape index: {}]
  %s2 = inlined_call_operand.hbm [shape: bf16[7,32,128], index: 2, kind: input, shape index: {}]
  %s3 = inlined_call_operand.hbm [shape: f32[8,128], index: 3, kind: input, shape index: {}]
  %s4 = inlined_call_operand.hbm [shape: f32[8,128], index: 4, kind: input, shape index: {}]
  %s5 = inlined_call_operand.hbm [shape: bf16[32,128], index: 5, kind: input, shape index: {}]
  %s6 = inlined_call_operand.vmem [shape: f32[1,128], index: 6, kind: input, shape index: {}]
  %s7 = inlined_call_operand.vmem [shape: f32[16,128], index: 7, kind: output, shape index: {}]
  %s8 = sld [smem:[#allocation0]]
  $region62: #{improved_dnn_forward.1} parent=0
    _
  %s10 = ssub.s32 1, %s8
  %s11 = scalar_select 0, %s10, %s8
  $region1: #{improved_dnn_forward.1} parent=0
    #allocation2 [shape = 'u8[8192]{0}', space=vmem, size = 0x2000, scoped, tag = 'input window, operand 0, single buffered']
    #allocation3 [shape = 's32[1]{0}', space=sflag, size = 0x4, scoped, tag = 'scoped memory for improved_dnn_forward.1']
    #allocation4 [shape = 'u8[4096]{0}', space=vmem, size = 0x1000, scoped, tag = 'input window, operand 1, single buffered']
    #allocation5 [shape = 's32[1]{0}', space=sflag, size = 0x4, scoped, tag = 'scoped memory for improved_dnn_forward.1']
    #allocation6 [shape = 'u8[57344]{0}', space=vmem, size = 0xe000, scoped, tag = 'input window, operand 2, single buffered']
    #allocation7 [shape = 'u8[4096]{0}', space=vmem, size = 0x1000, scoped, tag = 'input window, operand 3, single buffered']
    #allocation8 [shape = 's32[1]{0}', space=sflag, size = 0x4, scoped, tag = 'scoped memory for improved_dnn_forward.1']
    #allocation9 [shape = 'u8[4096]{0}', space=vmem, size = 0x1000, scoped, tag = 'input window, operand 4, single buffered']
    #allocation10 [shape = 'u8[8192]{0}', space=vmem, size = 0x2000, scoped, tag = 'input window, operand 5, single buffered']
    #allocation11 [shape = 's32[1]{0}', space=sflag, size = 0x4, scoped, tag = 'scoped memory for improved_dnn_forward.1']
    %12 = vsyncpa [#allocation3], 0
    %13 = vsyncpa [#allocation5], 0
    %14 = vsyncpa [#allocation8], 0
    %15 = vsyncpa [#allocation11], 0
    // Predicated region
    $region2: #{improved_dnn_forward.1} parent=1 // pred_check
      _
    $region3: #{improved_dnn_forward.1} parent=1 // pred_check_branch
      %17 = sbr.rel (0) target = $region5
    $region4: #{improved_dnn_forward.1} parent=1 // pred_region
      %19 = vsyncadd [#allocation3], 0
      %s20 = sshll.u32 %s0, 4
      %s21 = int_to_ptr.hbm [resolvable:$true] %s20
      %s22 = sshll.u32 [#allocation2], 4
      %s23 = int_to_ptr.vmem [resolvable:$true] %s22
      %28 = dma.hbm_to_vmem [thread:$0]  %s21, 256, %s23, [#allocation3], 128, 128, 8
    $region5: #{improved_dnn_forward.1} parent=1 // pred_fallthru
      _
    // Predicated region
    $region6: #{improved_dnn_forward.1} parent=1 // pred_check
      _
    $region7: #{improved_dnn_forward.1} parent=1 // pred_check_branch
      %30 = sbr.rel (0) target = $region9
    $region8: #{improved_dnn_forward.1} parent=1 // pred_region
      %32 = vsyncadd [#allocation5], 0
      %s33 = sshll.u32 %s1, 4
      %s34 = int_to_ptr.hbm [resolvable:$true] %s33
      %s35 = sshll.u32 [#allocation4], 4
      %s36 = int_to_ptr.vmem [resolvable:$true] %s35
      %41 = dma.hbm_to_vmem [thread:$0]  %s34, 128, %s36, [#allocation5], 64, 64, 4
    $region9: #{improved_dnn_forward.1} parent=1 // pred_fallthru
      _
    // Predicated region
    $region10: #{improved_dnn_forward.1} parent=1 // pred_check
      _
    $region11: #{improved_dnn_forward.1} parent=1 // pred_check_branch
      %43 = sbr.rel (0) target = $region13
    $region12: #{improved_dnn_forward.1} parent=1 // pred_region
      %45 = vsyncadd [#allocation5], 0
      %s46 = sshll.u32 %s2, 4
      %s47 = int_to_ptr.hbm [resolvable:$true] %s46
      %s48 = sshll.u32 [#allocation6], 4
      %s49 = int_to_ptr.vmem [resolvable:$true] %s48
      %54 = dma.hbm_to_vmem [thread:$0]  %s47, 1792, %s49, [#allocation5], 64, 64, 4
    $region13: #{improved_dnn_forward.1} parent=1 // pred_fallthru
      _
    // Predicated region
    $region14: #{improved_dnn_forward.1} parent=1 // pred_check
      _
    $region15: #{improved_dnn_forward.1} parent=1 // pred_check_branch
      %56 = sbr.rel (0) target = $region17
    $region16: #{improved_dnn_forward.1} parent=1 // pred_region
      %58 = vsyncadd [#allocation8], 0
      %s60 = sshll.u32 %s3, 4
      %s61 = int_to_ptr.hbm [resolvable:$true] %s60
      %s62 = sshll.u32 [#allocation7], 4
      %s63 = int_to_ptr.vmem [resolvable:$true] %s62
      %65 = dma.hbm_to_vmem [thread:$0]  %s61, 128, %s63, [#allocation8]
    $region17: #{improved_dnn_forward.1} parent=1 // pred_fallthru
      _
    // Predicated region
    $region18: #{improved_dnn_forward.1} parent=1 // pred_check
      _
    $region19: #{improved_dnn_forward.1} parent=1 // pred_check_branch
      %67 = sbr.rel (0) target = $region21
    $region20: #{improved_dnn_forward.1} parent=1 // pred_region
      %69 = vsyncadd [#allocation8], 0
      %s71 = sshll.u32 %s4, 4
      %s72 = int_to_ptr.hbm [resolvable:$true] %s71
      %s73 = sshll.u32 [#allocation9], 4
      %s74 = int_to_ptr.vmem [resolvable:$true] %s73
      %76 = dma.hbm_to_vmem [thread:$0]  %s72, 128, %s74, [#allocation8]
    $region21: #{improved_dnn_forward.1} parent=1 // pred_fallthru
      _
    // Predicated region
    $region22: #{improved_dnn_forward.1} parent=1 // pred_check
      _
    $region23: #{improved_dnn_forward.1} parent=1 // pred_check_branch
      %78 = sbr.rel (0) target = $region25
    $region24: #{improved_dnn_forward.1} parent=1 // pred_region
      %80 = vsyncadd [#allocation11], 0
      %s81 = sshll.u32 %s5, 4
      %s82 = int_to_ptr.hbm [resolvable:$true] %s81
      %s83 = sshll.u32 [#allocation10], 4
      %s84 = int_to_ptr.vmem [resolvable:$true] %s83
      %89 = dma.hbm_to_vmem [thread:$0]  %s82, 256, %s84, [#allocation11], 64, 64, 4
    $region25: #{improved_dnn_forward.1} parent=1 // pred_fallthru
      _
    // Predicated region
    $region26: #{improved_dnn_forward.1} parent=1 // pred_check
      _
    $region27: #{improved_dnn_forward.1} parent=1 // pred_check_branch
      %91 = sbr.rel (0) target = $region29
    $region28: #{improved_dnn_forward.1} parent=1 // pred_region
      _
    $region29: #{improved_dnn_forward.1} parent=1 // pred_fallthru
      _
    // Predicated region
    $region30: #{improved_dnn_forward.1} parent=1 // pred_check
      _
    $region31: #{improved_dnn_forward.1} parent=1 // pred_check_branch
      %93 = sbr.rel (0) target = $region33
    $region32: #{improved_dnn_forward.1} parent=1 // pred_region
      %95 = dma.done [#allocation3], 256
    $region33: #{improved_dnn_forward.1} parent=1 // pred_fallthru
      _
    // Predicated region
    $region34: #{improved_dnn_forward.1} parent=1 // pred_check
      _
    $region35: #{improved_dnn_forward.1} parent=1 // pred_check_branch
      %97 = sbr.rel (0) target = $region37
    $region36: #{improved_dnn_forward.1} parent=1 // pred_region
      %99 = dma.done [#allocation5], 128
    $region37: #{improved_dnn_forward.1} parent=1 // pred_fallthru
      _
    // Predicated region
    $region38: #{improved_dnn_forward.1} parent=1 // pred_check
      _
    $region39: #{improved_dnn_forward.1} parent=1 // pred_check_branch
      %101 = sbr.rel (0) target = $region41
    $region40: #{improved_dnn_forward.1} parent=1 // pred_region
      %103 = dma.done [#allocation5], 1792
    $region41: #{improved_dnn_forward.1} parent=1 // pred_fallthru
      _
    // Predicated region
    $region42: #{improved_dnn_forward.1} parent=1 // pred_check
      _
    $region43: #{improved_dnn_forward.1} parent=1 // pred_check_branch
      %105 = sbr.rel (0) target = $region45
    $region44: #{improved_dnn_forward.1} parent=1 // pred_region
      %107 = dma.done [#allocation8], 128
    $region45: #{improved_dnn_forward.1} parent=1 // pred_fallthru
      _
    // Predicated region
    $region46: #{improved_dnn_forward.1} parent=1 // pred_check
      _
    $region47: #{improved_dnn_forward.1} parent=1 // pred_check_branch
      %109 = sbr.rel (0) target = $region49
    $region48: #{improved_dnn_forward.1} parent=1 // pred_region
      %111 = dma.done [#allocation8], 128
    $region49: #{improved_dnn_forward.1} parent=1 // pred_fallthru
      _
    // Predicated region
    $region50: #{improved_dnn_forward.1} parent=1 // pred_check
      _
    $region51: #{improved_dnn_forward.1} parent=1 // pred_check_branch
      %113 = sbr.rel (0) target = $region53
    $region52: #{improved_dnn_forward.1} parent=1 // pred_region
      %115 = dma.done [#allocation11], 256
    $region53: #{improved_dnn_forward.1} parent=1 // pred_fallthru
      _
    %v116 = vld [vmem:[#allocation4] sm:$0xf]
    %v117 = vld [vmem:[#allocation4 + $0x4] sm:$0xf]
    %v118 = vunpack.c.l.bf16 %v116
    %v119 = vunpack.c.l.bf16 %v117
    %v120 = vld [vmem:[#allocation2] sm:$0xff]
    %v121 = vld [vmem:[#allocation2 + $0x8] sm:$0xff]
    %vm122 = vcmask 130048
    %v124 = vsel %vm122, %v120, 0
    %v127 = vsel %vm122, %v121, 0
    %129 = vmatpush.msra.mxu0 0.0
    %130 = vmatpush.msra.mxu0 0.0
    %131 = vmatpush.msra.mxu0 0.0
    %132 = vmatpush.msra.mxu0 0.0
    %133 = vmatpush.msra.mxu0 0.0
    %134 = vmatpush.msra.mxu0 0.0
    %135 = vmatpush.msra.mxu0 0.0
    %136 = vmatpush.msra.mxu0 0.0
    %137 = vmatpush.msra.mxu0 0.0
    %138 = vmatpush.msra.mxu0 0.0
    %139 = vmatpush.msra.mxu0 0.0
    %140 = vmatpush.msra.mxu0 0.0
    %141 = vmatpush.msra.mxu0 0.0
    %142 = vmatpush.msra.mxu0 0.0
    %143 = vmatpush.msra.mxu0 %v119
    %144 = vmatpush.msra.mxu0 %v118
    %145 = vmatmul.f32.gmra.mxu0 %v124
    %v146 = vpop.f32.mrf.mxu0
    %v147 = vadd.f32 0.0, %v146
    %148 = vmatmul.f32.gmra.mxu0 %v127
    %v149 = vpop.f32.mrf.mxu0
    %v150 = vadd.f32 0.0, %v149
    %151 = vdwg.mxu0
    %v152 = vadd.f32 %v147, %v150
    %v153 = vrot.slane %v152, 4
    %v154 = vadd.f32 %v152, %v153
    %v155 = vrot.slane %v154, 2
    %v156 = vadd.f32 %v154, %v155
    %v157 = vrot.slane %v156, 1
    %v158 = vadd.f32 %v156, %v157
    %v159 = vrcp.pop 16.0
    %v160 = vmul.f32 16.0, %v159
    %v161 = vsub.f32 1.0, %v160
    %v162 = vmul.f32 %v159, %v161
    %v163 = vadd.f32 %v159, %v162
    %vm164 = vweird.f32 %v159
    %v165 = vsel %vm164, %v159, %v163
    %v166 = vmul.f32 %v158, %v165
    %v167 = vsub.f32 %v147, %v166
    %v168 = vsub.f32 %v150, %v166
    %v169 = vmul.f32 %v167, %v167
    %v170 = vmul.f32 %v168, %v168
    %v171 = vadd.f32 %v169, %v170
    %v172 = vrot.slane %v171, 4
    %v173 = vadd.f32 %v171, %v172
    %v174 = vrot.slane %v173, 2
    %v175 = vadd.f32 %v173, %v174
    %v176 = vrot.slane %v175, 1
    %v177 = vadd.f32 %v175, %v176
    %v178 = vmul.f32 %v177, %v165
    %v179 = vadd.f32 %v178, 1e-05
    %v180 = vrsqrt.pop %v179
    %v181 = vmul.f32 %v180, %v179
    %v182 = vmul.f32 %v181, %v180
    %v183 = vmul.f32 0.5, %v182
    %v184 = vsub.f32 1.5, %v183
    %v185 = vmul.f32 %v180, %v184
    %vm186 = vweird.f32 %v179
    %vm187 = vweird.f32 %v180
    %vm188 = vmor %vm186, %vm187
    %v189 = vsel %vm188, %v180, %v185
    %v190 = vmul.f32 %v167, %v189
    %v191 = vmul.f32 %v168, %v189
    %v192 = vld [vmem:[#allocation7] sm:$0x1]
    %v193 = vperm.slane %v192, 0
    %v194 = vmul.f32 %v190, %v193
    %v195 = vmul.f32 %v191, %v193
    %v196 = vld [vmem:[#allocation9] sm:$0x1]
    %v197 = vperm.slane %v196, 0
    %v198 = vadd.f32 %v194, %v197
    %v199 = vadd.f32 %v195, %v197
    %v200 = vmul.f32 %v198, 0.5
    %v201 = vmul.f32 %v199, 0.5
    %v202 = vmul.f32 %v198, 0.70710677
    %v203 = vmul.f32 %v199, 0.70710677
    %v204 = vmul.f32 %v202, %v202
    %v205 = vmin.f32 16.0, %v204
    %v206 = vmul.f32 %v205, 2.1237322e-06
    %v207 = vadd.f32 %v206, 0.00028619796
    %v208 = vmul.f32 %v205, %v207
    %v209 = vadd.f32 %v208, 0.0036580483
    %v210 = vmul.f32 %v205, %v209
    %v211 = vadd.f32 %v210, 0.05243302
    %v212 = vmul.f32 %v205, %v211
    %v213 = vadd.f32 %v212, 0.18741608
    %v214 = vmul.f32 %v205, %v213
    %v215 = vadd.f32 %v214, 1.1283791
    %v216 = vmul.f32 %v202, %v215
    %v217 = vmul.f32 %v205, 3.8918573e-05
    %v218 = vadd.f32 %v217, 0.001143296
    %v219 = vmul.f32 %v205, %v218
    %v220 = vadd.f32 %v219, 0.014752088
    %v221 = vmul.f32 %v205, %v220
    %v222 = vadd.f32 %v221, 0.112945676
    %v223 = vmul.f32 %v205, %v222
    %v224 = vadd.f32 %v223, 0.4994258
    %v225 = vmul.f32 %v205, %v224
    %v226 = vadd.f32 %v225, 1.0
    %v227 = vrcp.pop %v226
    %v228 = vmul.f32 %v226, %v227
    %v229 = vsub.f32 1.0, %v228
    %v230 = vmul.f32 %v227, %v229
    %v231 = vadd.f32 %v227, %v230
    %vm232 = vweird.f32 %v226
    %vm233 = vweird.f32 %v227
    %vm234 = vmor %vm232, %vm233
    %v235 = vsel %vm234, %v227, %v231
    %v236 = vand.u32 2147483647, %v226
    %vm237 = vcmp.eq.f32.partialorder %v236, 8.507059e+37
    %v238 = vand.u32 %v226, 2147483648
    %v239 = vor.u32 1.1754944e-38, %v238
    %v240 = vsel %vm237, %v239, %v235
    %v241 = vmul.f32 %v216, %v240
    %v242 = vmin.f32 %v241, 1.0
    %v243 = vmax.f32 %v242, -1.0
    %v244 = vmul.f32 %v203, %v203
    %v245 = vmin.f32 16.0, %v244
    %v246 = vmul.f32 %v245, 2.1237322e-06
    %v247 = vadd.f32 %v246, 0.00028619796
    %v248 = vmul.f32 %v245, %v247
    %v249 = vadd.f32 %v248, 0.0036580483
    %v250 = vmul.f32 %v245, %v249
    %v251 = vadd.f32 %v250, 0.05243302
    %v252 = vmul.f32 %v245, %v251
    %v253 = vadd.f32 %v252, 0.18741608
    %v254 = vmul.f32 %v245, %v253
    %v255 = vadd.f32 %v254, 1.1283791
    %v256 = vmul.f32 %v203, %v255
    %v257 = vmul.f32 %v245, 3.8918573e-05
    %v258 = vadd.f32 %v257, 0.001143296
    %v259 = vmul.f32 %v245, %v258
    %v260 = vadd.f32 %v259, 0.014752088
    %v261 = vmul.f32 %v245, %v260
    %v262 = vadd.f32 %v261, 0.112945676
    %v263 = vmul.f32 %v245, %v262
    %v264 = vadd.f32 %v263, 0.4994258
    %v265 = vmul.f32 %v245, %v264
    %v266 = vadd.f32 %v265, 1.0
    %v267 = vrcp.pop %v266
    %v268 = vmul.f32 %v266, %v267
    %v269 = vsub.f32 1.0, %v268
    %v270 = vmul.f32 %v267, %v269
    %v271 = vadd.f32 %v267, %v270
    %vm272 = vweird.f32 %v266
    %vm273 = vweird.f32 %v267
    %vm274 = vmor %vm272, %vm273
    %v275 = vsel %vm274, %v267, %v271
    %v276 = vand.u32 2147483647, %v266
    %vm277 = vcmp.eq.f32.partialorder %v276, 8.507059e+37
    %v278 = vand.u32 %v266, 2147483648
    %v279 = vor.u32 1.1754944e-38, %v278
    %v280 = vsel %vm277, %v279, %v275
    %v281 = vmul.f32 %v256, %v280
    %v282 = vmin.f32 %v281, 1.0
    %v283 = vmax.f32 %v282, -1.0
    %v284 = vadd.f32 %v243, 1.0
    %v285 = vadd.f32 %v283, 1.0
    %v286 = vmul.f32 %v200, %v284
    %v287 = vmul.f32 %v201, %v285
    %v288 = vld [vmem:[#allocation6] sm:$0xf]
    %v289 = vld [vmem:[#allocation6 + $0x4] sm:$0xf]
    %v290 = vld [vmem:[#allocation6 + $0x8] sm:$0xf]
    %v291 = vld [vmem:[#allocation6 + $0xc] sm:$0xf]
    %v292 = vunpack.c.l.bf16 %v288
    %v293 = vunpack.c.l.bf16 %v289
    %v294 = vunpack.c.l.bf16 %v290
    %v295 = vunpack.c.l.bf16 %v291
    %vm296 = vcmask 261120
    %v298 = vsel %vm296, %v286, 0
    %v301 = vsel %vm296, %v287, 0
    %303 = vmatpush.msra.mxu0 0.0
    %304 = vmatpush.msra.mxu0 0.0
    %305 = vmatpush.msra.mxu0 0.0
    %306 = vmatpush.msra.mxu0 0.0
    %307 = vmatpush.msra.mxu0 0.0
    %308 = vmatpush.msra.mxu0 0.0
    %309 = vmatpush.msra.mxu0 0.0
    %310 = vmatpush.msra.mxu0 0.0
    %311 = vmatpush.msra.mxu0 0.0
    %312 = vmatpush.msra.mxu0 0.0
    %313 = vmatpush.msra.mxu0 0.0
    %314 = vmatpush.msra.mxu0 0.0
    %315 = vmatpush.msra.mxu0 %v295
    %316 = vmatpush.msra.mxu0 %v294
    %317 = vmatpush.msra.mxu0 %v293
    %318 = vmatpush.msra.mxu0 %v292
    %319 = vmatmul.f32.gmra.mxu0 %v298
    %v320 = vpop.f32.mrf.mxu0
    %v321 = vadd.f32 0.0, %v320
    %322 = vmatmul.f32.gmra.mxu0 %v301
    %v323 = vpop.f32.mrf.mxu0
    %v324 = vadd.f32 0.0, %v323
    %325 = vdwg.mxu0
    %v326 = vadd.f32 %v321, %v324
    %v327 = vrot.slane %v326, 4
    %v328 = vadd.f32 %v326, %v327
    %v329 = vrot.slane %v328, 2
    %v330 = vadd.f32 %v328, %v329
    %v331 = vrot.slane %v330, 1
    %v332 = vadd.f32 %v330, %v331
    %v333 = vmul.f32 %v332, %v165
    %v334 = vsub.f32 %v321, %v333
    %v335 = vsub.f32 %v324, %v333
    %v336 = vmul.f32 %v334, %v334
    %v337 = vmul.f32 %v335, %v335
    %v338 = vadd.f32 %v336, %v337
    %v339 = vrot.slane %v338, 4
    %v340 = vadd.f32 %v338, %v339
    %v341 = vrot.slane %v340, 2
    %v342 = vadd.f32 %v340, %v341
    %v343 = vrot.slane %v342, 1
    %v344 = vadd.f32 %v342, %v343
    %v345 = vmul.f32 %v344, %v165
    %v346 = vadd.f32 %v345, 1e-05
    %v347 = vrsqrt.pop %v346
    %v348 = vmul.f32 %v347, %v346
    %v349 = vmul.f32 %v348, %v347
    %v350 = vmul.f32 0.5, %v349
    %v351 = vsub.f32 1.5, %v350
    %v352 = vmul.f32 %v347, %v351
    %vm353 = vweird.f32 %v346
    %vm354 = vweird.f32 %v347
    %vm355 = vmor %vm353, %vm354
    %v356 = vsel %vm355, %v347, %v352
    %v357 = vmul.f32 %v334, %v356
    %v358 = vmul.f32 %v335, %v356
    %v359 = vld [vmem:[#allocation7 + $0x1] sm:$0x1]
    %v360 = vperm.slane %v359, 0
    %v361 = vmul.f32 %v357, %v360
    %v362 = vmul.f32 %v358, %v360
    %v363 = vld [vmem:[#allocation9 + $0x1] sm:$0x1]
    %v364 = vperm.slane %v363, 0
    %v365 = vadd.f32 %v361, %v364
    %v366 = vadd.f32 %v362, %v364
    %v367 = vmul.f32 %v365, 0.5
    %v368 = vmul.f32 %v366, 0.5
    %v369 = vmul.f32 %v365, 0.70710677
    %v370 = vmul.f32 %v366, 0.70710677
    %v371 = vmul.f32 %v369, %v369
    %v372 = vmin.f32 16.0, %v371
    %v373 = vmul.f32 %v372, 2.1237322e-06
    %v374 = vadd.f32 %v373, 0.00028619796
    %v375 = vmul.f32 %v372, %v374
    %v376 = vadd.f32 %v375, 0.0036580483
    %v377 = vmul.f32 %v372, %v376
    %v378 = vadd.f32 %v377, 0.05243302
    %v379 = vmul.f32 %v372, %v378
    %v380 = vadd.f32 %v379, 0.18741608
    %v381 = vmul.f32 %v372, %v380
    %v382 = vadd.f32 %v381, 1.1283791
    %v383 = vmul.f32 %v369, %v382
    %v384 = vmul.f32 %v372, 3.8918573e-05
    %v385 = vadd.f32 %v384, 0.001143296
    %v386 = vmul.f32 %v372, %v385
    %v387 = vadd.f32 %v386, 0.014752088
    %v388 = vmul.f32 %v372, %v387
    %v389 = vadd.f32 %v388, 0.112945676
    %v390 = vmul.f32 %v372, %v389
    %v391 = vadd.f32 %v390, 0.4994258
    %v392 = vmul.f32 %v372, %v391
    %v393 = vadd.f32 %v392, 1.0
    %v394 = vrcp.pop %v393
    %v395 = vmul.f32 %v393, %v394
    %v396 = vsub.f32 1.0, %v395
    %v397 = vmul.f32 %v394, %v396
    %v398 = vadd.f32 %v394, %v397
    %vm399 = vweird.f32 %v393
    %vm400 = vweird.f32 %v394
    %vm401 = vmor %vm399, %vm400
    %v402 = vsel %vm401, %v394, %v398
    %v403 = vand.u32 2147483647, %v393
    %vm404 = vcmp.eq.f32.partialorder %v403, 8.507059e+37
    %v405 = vand.u32 %v393, 2147483648
    %v406 = vor.u32 1.1754944e-38, %v405
    %v407 = vsel %vm404, %v406, %v402
    %v408 = vmul.f32 %v383, %v407
    %v409 = vmin.f32 %v408, 1.0
    %v410 = vmax.f32 %v409, -1.0
    %v411 = vmul.f32 %v370, %v370
    %v412 = vmin.f32 16.0, %v411
    %v413 = vmul.f32 %v412, 2.1237322e-06
    %v414 = vadd.f32 %v413, 0.00028619796
    %v415 = vmul.f32 %v412, %v414
    %v416 = vadd.f32 %v415, 0.0036580483
    %v417 = vmul.f32 %v412, %v416
    %v418 = vadd.f32 %v417, 0.05243302
    %v419 = vmul.f32 %v412, %v418
    %v420 = vadd.f32 %v419, 0.18741608
    %v421 = vmul.f32 %v412, %v420
    %v422 = vadd.f32 %v421, 1.1283791
    %v423 = vmul.f32 %v370, %v422
    %v424 = vmul.f32 %v412, 3.8918573e-05
    %v425 = vadd.f32 %v424, 0.001143296
    %v426 = vmul.f32 %v412, %v425
    %v427 = vadd.f32 %v426, 0.014752088
    %v428 = vmul.f32 %v412, %v427
    %v429 = vadd.f32 %v428, 0.112945676
    %v430 = vmul.f32 %v412, %v429
    %v431 = vadd.f32 %v430, 0.4994258
    %v432 = vmul.f32 %v412, %v431
    %v433 = vadd.f32 %v432, 1.0
    %v434 = vrcp.pop %v433
    %v435 = vmul.f32 %v433, %v434
    %v436 = vsub.f32 1.0, %v435
    %v437 = vmul.f32 %v434, %v436
    %v438 = vadd.f32 %v434, %v437
    %vm439 = vweird.f32 %v433
    %vm440 = vweird.f32 %v434
    %vm441 = vmor %vm439, %vm440
    %v442 = vsel %vm441, %v434, %v438
    %v443 = vand.u32 2147483647, %v433
    %vm444 = vcmp.eq.f32.partialorder %v443, 8.507059e+37
    %v445 = vand.u32 %v433, 2147483648
    %v446 = vor.u32 1.1754944e-38, %v445
    %v447 = vsel %vm444, %v446, %v442
    %v448 = vmul.f32 %v423, %v447
    %v449 = vmin.f32 %v448, 1.0
    %v450 = vmax.f32 %v449, -1.0
    %v451 = vadd.f32 %v410, 1.0
    %v452 = vadd.f32 %v450, 1.0
    %v453 = vmul.f32 %v367, %v451
    %v454 = vmul.f32 %v368, %v452
    %s455 = scalar_lea.vmem [#allocation6], 16
    %v456 = vld [vmem:[%s455] sm:$0xf]
    %v457 = vld [vmem:[%s455 + $0x4] sm:$0xf]
    %v458 = vld [vmem:[%s455 + $0x8] sm:$0xf]
    %v459 = vld [vmem:[%s455 + $0xc] sm:$0xf]
    %v460 = vunpack.c.l.bf16 %v456
    %v461 = vunpack.c.l.bf16 %v457
    %v462 = vunpack.c.l.bf16 %v458
    %v463 = vunpack.c.l.bf16 %v459
    %v465 = vsel %vm296, %v453, 0
    %v468 = vsel %vm296, %v454, 0
    %470 = vmatpush.msra.mxu0 0.0
    %471 = vmatpush.msra.mxu0 0.0
    %472 = vmatpush.msra.mxu0 0.0
    %473 = vmatpush.msra.mxu0 0.0
    %474 = vmatpush.msra.mxu0 0.0
    %475 = vmatpush.msra.mxu0 0.0
    %476 = vmatpush.msra.mxu0 0.0
    %477 = vmatpush.msra.mxu0 0.0
    %478 = vmatpush.msra.mxu0 0.0
    %479 = vmatpush.msra.mxu0 0.0
    %480 = vmatpush.msra.mxu0 0.0
    %481 = vmatpush.msra.mxu0 0.0
    %482 = vmatpush.msra.mxu0 %v463
    %483 = vmatpush.msra.mxu0 %v462
    %484 = vmatpush.msra.mxu0 %v461
    %485 = vmatpush.msra.mxu0 %v460
    %486 = vmatmul.f32.gmra.mxu0 %v465
    %v487 = vpop.f32.mrf.mxu0
    %v488 = vadd.f32 0.0, %v487
    %489 = vmatmul.f32.gmra.mxu0 %v468
    %v490 = vpop.f32.mrf.mxu0
    %v491 = vadd.f32 0.0, %v490
    %492 = vdwg.mxu0
    %v493 = vadd.f32 %v488, %v491
    %v494 = vrot.slane %v493, 4
    %v495 = vadd.f32 %v493, %v494
    %v496 = vrot.slane %v495, 2
    %v497 = vadd.f32 %v495, %v496
    %v498 = vrot.slane %v497, 1
    %v499 = vadd.f32 %v497, %v498
    %v500 = vmul.f32 %v499, %v165
    %v501 = vsub.f32 %v488, %v500
    %v502 = vsub.f32 %v491, %v500
    %v503 = vmul.f32 %v501, %v501
    %v504 = vmul.f32 %v502, %v502
    %v505 = vadd.f32 %v503, %v504
    %v506 = vrot.slane %v505, 4
    %v507 = vadd.f32 %v505, %v506
    %v508 = vrot.slane %v507, 2
    %v509 = vadd.f32 %v507, %v508
    %v510 = vrot.slane %v509, 1
    %v511 = vadd.f32 %v509, %v510
    %v512 = vmul.f32 %v511, %v165
    %v513 = vadd.f32 %v512, 1e-05
    %v514 = vrsqrt.pop %v513
    %v515 = vmul.f32 %v514, %v513
    %v516 = vmul.f32 %v515, %v514
    %v517 = vmul.f32 0.5, %v516
    %v518 = vsub.f32 1.5, %v517
    %v519 = vmul.f32 %v514, %v518
    %vm520 = vweird.f32 %v513
    %vm521 = vweird.f32 %v514
    %vm522 = vmor %vm520, %vm521
    %v523 = vsel %vm522, %v514, %v519
    %v524 = vmul.f32 %v501, %v523
    %v525 = vmul.f32 %v502, %v523
    %v526 = vld [vmem:[#allocation7 + $0x2] sm:$0x1]
    %v527 = vperm.slane %v526, 0
    %v528 = vmul.f32 %v524, %v527
    %v529 = vmul.f32 %v525, %v527
    %v530 = vld [vmem:[#allocation9 + $0x2] sm:$0x1]
    %v531 = vperm.slane %v530, 0
    %v532 = vadd.f32 %v528, %v531
    %v533 = vadd.f32 %v529, %v531
    %v534 = vadd.f32 %v286, %v532
    %v535 = vadd.f32 %v287, %v533
    %v536 = vmul.f32 %v534, 0.5
    %v537 = vmul.f32 %v535, 0.5
    %v538 = vmul.f32 %v534, 0.70710677
    %v539 = vmul.f32 %v535, 0.70710677
    %v540 = vmul.f32 %v538, %v538
    %v541 = vmin.f32 16.0, %v540
    %v542 = vmul.f32 %v541, 2.1237322e-06
    %v543 = vadd.f32 %v542, 0.00028619796
    %v544 = vmul.f32 %v541, %v543
    %v545 = vadd.f32 %v544, 0.0036580483
    %v546 = vmul.f32 %v541, %v545
    %v547 = vadd.f32 %v546, 0.05243302
    %v548 = vmul.f32 %v541, %v547
    %v549 = vadd.f32 %v548, 0.18741608
    %v550 = vmul.f32 %v541, %v549
    %v551 = vadd.f32 %v550, 1.1283791
    %v552 = vmul.f32 %v538, %v551
    %v553 = vmul.f32 %v541, 3.8918573e-05
    %v554 = vadd.f32 %v553, 0.001143296
    %v555 = vmul.f32 %v541, %v554
    %v556 = vadd.f32 %v555, 0.014752088
    %v557 = vmul.f32 %v541, %v556
    %v558 = vadd.f32 %v557, 0.112945676
    %v559 = vmul.f32 %v541, %v558
    %v560 = vadd.f32 %v559, 0.4994258
    %v561 = vmul.f32 %v541, %v560
    %v562 = vadd.f32 %v561, 1.0
    %v563 = vrcp.pop %v562
    %v564 = vmul.f32 %v562, %v563
    %v565 = vsub.f32 1.0, %v564
    %v566 = vmul.f32 %v563, %v565
    %v567 = vadd.f32 %v563, %v566
    %vm568 = vweird.f32 %v562
    %vm569 = vweird.f32 %v563
    %vm570 = vmor %vm568, %vm569
    %v571 = vsel %vm570, %v563, %v567
    %v572 = vand.u32 2147483647, %v562
    %vm573 = vcmp.eq.f32.partialorder %v572, 8.507059e+37
    %v574 = vand.u32 %v562, 2147483648
    %v575 = vor.u32 1.1754944e-38, %v574
    %v576 = vsel %vm573, %v575, %v571
    %v577 = vmul.f32 %v552, %v576
    %v578 = vmin.f32 %v577, 1.0
    %v579 = vmax.f32 %v578, -1.0
    %v580 = vmul.f32 %v539, %v539
    %v581 = vmin.f32 16.0, %v580
    %v582 = vmul.f32 %v581, 2.1237322e-06
    %v583 = vadd.f32 %v582, 0.00028619796
    %v584 = vmul.f32 %v581, %v583
    %v585 = vadd.f32 %v584, 0.0036580483
    %v586 = vmul.f32 %v581, %v585
    %v587 = vadd.f32 %v586, 0.05243302
    %v588 = vmul.f32 %v581, %v587
    %v589 = vadd.f32 %v588, 0.18741608
    %v590 = vmul.f32 %v581, %v589
    %v591 = vadd.f32 %v590, 1.1283791
    %v592 = vmul.f32 %v539, %v591
    %v593 = vmul.f32 %v581, 3.8918573e-05
    %v594 = vadd.f32 %v593, 0.001143296
    %v595 = vmul.f32 %v581, %v594
    %v596 = vadd.f32 %v595, 0.014752088
    %v597 = vmul.f32 %v581, %v596
    %v598 = vadd.f32 %v597, 0.112945676
    %v599 = vmul.f32 %v581, %v598
    %v600 = vadd.f32 %v599, 0.4994258
    %v601 = vmul.f32 %v581, %v600
    %v602 = vadd.f32 %v601, 1.0
    %v603 = vrcp.pop %v602
    %v604 = vmul.f32 %v602, %v603
    %v605 = vsub.f32 1.0, %v604
    %v606 = vmul.f32 %v603, %v605
    %v607 = vadd.f32 %v603, %v606
    %vm608 = vweird.f32 %v602
    %vm609 = vweird.f32 %v603
    %vm610 = vmor %vm608, %vm609
    %v611 = vsel %vm610, %v603, %v607
    %v612 = vand.u32 2147483647, %v602
    %vm613 = vcmp.eq.f32.partialorder %v612, 8.507059e+37
    %v614 = vand.u32 %v602, 2147483648
    %v615 = vor.u32 1.1754944e-38, %v614
    %v616 = vsel %vm613, %v615, %v611
    %v617 = vmul.f32 %v592, %v616
    %v618 = vmin.f32 %v617, 1.0
    %v619 = vmax.f32 %v618, -1.0
    %v620 = vadd.f32 %v579, 1.0
    %v621 = vadd.f32 %v619, 1.0
    %v622 = vmul.f32 %v536, %v620
    %v623 = vmul.f32 %v537, %v621
    %s624 = scalar_lea.vmem [#allocation6], 32
    %v625 = vld [vmem:[%s624] sm:$0xf]
    %v626 = vld [vmem:[%s624 + $0x4] sm:$0xf]
    %v627 = vld [vmem:[%s624 + $0x8] sm:$0xf]
    %v628 = vld [vmem:[%s624 + $0xc] sm:$0xf]
    %v629 = vunpack.c.l.bf16 %v625
    %v630 = vunpack.c.l.bf16 %v626
    %v631 = vunpack.c.l.bf16 %v627
    %v632 = vunpack.c.l.bf16 %v628
    %v634 = vsel %vm296, %v622, 0
    %v637 = vsel %vm296, %v623, 0
    %639 = vmatpush.msra.mxu0 0.0
    %640 = vmatpush.msra.mxu0 0.0
    %641 = vmatpush.msra.mxu0 0.0
    %642 = vmatpush.msra.mxu0 0.0
    %643 = vmatpush.msra.mxu0 0.0
    %644 = vmatpush.msra.mxu0 0.0
    %645 = vmatpush.msra.mxu0 0.0
    %646 = vmatpush.msra.mxu0 0.0
    %647 = vmatpush.msra.mxu0 0.0
    %648 = vmatpush.msra.mxu0 0.0
    %649 = vmatpush.msra.mxu0 0.0
    %650 = vmatpush.msra.mxu0 0.0
    %651 = vmatpush.msra.mxu0 %v632
    %652 = vmatpush.msra.mxu0 %v631
    %653 = vmatpush.msra.mxu0 %v630
    %654 = vmatpush.msra.mxu0 %v629
    %655 = vmatmul.f32.gmra.mxu0 %v634
    %v656 = vpop.f32.mrf.mxu0
    %v657 = vadd.f32 0.0, %v656
    %658 = vmatmul.f32.gmra.mxu0 %v637
    %v659 = vpop.f32.mrf.mxu0
    %v660 = vadd.f32 0.0, %v659
    %661 = vdwg.mxu0
    %v662 = vadd.f32 %v657, %v660
    %v663 = vrot.slane %v662, 4
    %v664 = vadd.f32 %v662, %v663
    %v665 = vrot.slane %v664, 2
    %v666 = vadd.f32 %v664, %v665
    %v667 = vrot.slane %v666, 1
    %v668 = vadd.f32 %v666, %v667
    %v669 = vmul.f32 %v668, %v165
    %v670 = vsub.f32 %v657, %v669
    %v671 = vsub.f32 %v660, %v669
    %v672 = vmul.f32 %v670, %v670
    %v673 = vmul.f32 %v671, %v671
    %v674 = vadd.f32 %v672, %v673
    %v675 = vrot.slane %v674, 4
    %v676 = vadd.f32 %v674, %v675
    %v677 = vrot.slane %v676, 2
    %v678 = vadd.f32 %v676, %v677
    %v679 = vrot.slane %v678, 1
    %v680 = vadd.f32 %v678, %v679
    %v681 = vmul.f32 %v680, %v165
    %v682 = vadd.f32 %v681, 1e-05
    %v683 = vrsqrt.pop %v682
    %v684 = vmul.f32 %v683, %v682
    %v685 = vmul.f32 %v684, %v683
    %v686 = vmul.f32 0.5, %v685
    %v687 = vsub.f32 1.5, %v686
    %v688 = vmul.f32 %v683, %v687
    %vm689 = vweird.f32 %v682
    %vm690 = vweird.f32 %v683
    %vm691 = vmor %vm689, %vm690
    %v692 = vsel %vm691, %v683, %v688
    %v693 = vmul.f32 %v670, %v692
    %v694 = vmul.f32 %v671, %v692
    %v695 = vld [vmem:[#allocation7 + $0x3] sm:$0x1]
    %v696 = vperm.slane %v695, 0
    %v697 = vmul.f32 %v693, %v696
    %v698 = vmul.f32 %v694, %v696
    %v699 = vld [vmem:[#allocation9 + $0x3] sm:$0x1]
    %v700 = vperm.slane %v699, 0
    %v701 = vadd.f32 %v697, %v700
    %v702 = vadd.f32 %v698, %v700
    %v703 = vmul.f32 %v701, 0.5
    %v704 = vmul.f32 %v702, 0.5
    %v705 = vmul.f32 %v701, 0.70710677
    %v706 = vmul.f32 %v702, 0.70710677
    %v707 = vmul.f32 %v705, %v705
    %v708 = vmin.f32 16.0, %v707
    %v709 = vmul.f32 %v708, 2.1237322e-06
    %v710 = vadd.f32 %v709, 0.00028619796
    %v711 = vmul.f32 %v708, %v710
    %v712 = vadd.f32 %v711, 0.0036580483
    %v713 = vmul.f32 %v708, %v712
    %v714 = vadd.f32 %v713, 0.05243302
    %v715 = vmul.f32 %v708, %v714
    %v716 = vadd.f32 %v715, 0.18741608
    %v717 = vmul.f32 %v708, %v716
    %v718 = vadd.f32 %v717, 1.1283791
    %v719 = vmul.f32 %v705, %v718
    %v720 = vmul.f32 %v708, 3.8918573e-05
    %v721 = vadd.f32 %v720, 0.001143296
    %v722 = vmul.f32 %v708, %v721
    %v723 = vadd.f32 %v722, 0.014752088
    %v724 = vmul.f32 %v708, %v723
    %v725 = vadd.f32 %v724, 0.112945676
    %v726 = vmul.f32 %v708, %v725
    %v727 = vadd.f32 %v726, 0.4994258
    %v728 = vmul.f32 %v708, %v727
    %v729 = vadd.f32 %v728, 1.0
    %v730 = vrcp.pop %v729
    %v731 = vmul.f32 %v729, %v730
    %v732 = vsub.f32 1.0, %v731
    %v733 = vmul.f32 %v730, %v732
    %v734 = vadd.f32 %v730, %v733
    %vm735 = vweird.f32 %v729
    %vm736 = vweird.f32 %v730
    %vm737 = vmor %vm735, %vm736
    %v738 = vsel %vm737, %v730, %v734
    %v739 = vand.u32 2147483647, %v729
    %vm740 = vcmp.eq.f32.partialorder %v739, 8.507059e+37
    %v741 = vand.u32 %v729, 2147483648
    %v742 = vor.u32 1.1754944e-38, %v741
    %v743 = vsel %vm740, %v742, %v738
    %v744 = vmul.f32 %v719, %v743
    %v745 = vmin.f32 %v744, 1.0
    %v746 = vmax.f32 %v745, -1.0
    %v747 = vmul.f32 %v706, %v706
    %v748 = vmin.f32 16.0, %v747
    %v749 = vmul.f32 %v748, 2.1237322e-06
    %v750 = vadd.f32 %v749, 0.00028619796
    %v751 = vmul.f32 %v748, %v750
    %v752 = vadd.f32 %v751, 0.0036580483
    %v753 = vmul.f32 %v748, %v752
    %v754 = vadd.f32 %v753, 0.05243302
    %v755 = vmul.f32 %v748, %v754
    %v756 = vadd.f32 %v755, 0.18741608
    %v757 = vmul.f32 %v748, %v756
    %v758 = vadd.f32 %v757, 1.1283791
    %v759 = vmul.f32 %v706, %v758
    %v760 = vmul.f32 %v748, 3.8918573e-05
    %v761 = vadd.f32 %v760, 0.001143296
    %v762 = vmul.f32 %v748, %v761
    %v763 = vadd.f32 %v762, 0.014752088
    %v764 = vmul.f32 %v748, %v763
    %v765 = vadd.f32 %v764, 0.112945676
    %v766 = vmul.f32 %v748, %v765
    %v767 = vadd.f32 %v766, 0.4994258
    %v768 = vmul.f32 %v748, %v767
    %v769 = vadd.f32 %v768, 1.0
    %v770 = vrcp.pop %v769
    %v771 = vmul.f32 %v769, %v770
    %v772 = vsub.f32 1.0, %v771
    %v773 = vmul.f32 %v770, %v772
    %v774 = vadd.f32 %v770, %v773
    %vm775 = vweird.f32 %v769
    %vm776 = vweird.f32 %v770
    %vm777 = vmor %vm775, %vm776
    %v778 = vsel %vm777, %v770, %v774
    %v779 = vand.u32 2147483647, %v769
    %vm780 = vcmp.eq.f32.partialorder %v779, 8.507059e+37
    %v781 = vand.u32 %v769, 2147483648
    %v782 = vor.u32 1.1754944e-38, %v781
    %v783 = vsel %vm780, %v782, %v778
    %v784 = vmul.f32 %v759, %v783
    %v785 = vmin.f32 %v784, 1.0
    %v786 = vmax.f32 %v785, -1.0
    %v787 = vadd.f32 %v746, 1.0
    %v788 = vadd.f32 %v786, 1.0
    %v789 = vmul.f32 %v703, %v787
    %v790 = vmul.f32 %v704, %v788
    %s791 = scalar_lea.vmem [#allocation6], 48
    %v792 = vld [vmem:[%s791] sm:$0xf]
    %v793 = vld [vmem:[%s791 + $0x4] sm:$0xf]
    %v794 = vld [vmem:[%s791 + $0x8] sm:$0xf]
    %v795 = vld [vmem:[%s791 + $0xc] sm:$0xf]
    %v796 = vunpack.c.l.bf16 %v792
    %v797 = vunpack.c.l.bf16 %v793
    %v798 = vunpack.c.l.bf16 %v794
    %v799 = vunpack.c.l.bf16 %v795
    %v801 = vsel %vm296, %v789, 0
    %v804 = vsel %vm296, %v790, 0
    %806 = vmatpush.msra.mxu0 0.0
    %807 = vmatpush.msra.mxu0 0.0
    %808 = vmatpush.msra.mxu0 0.0
    %809 = vmatpush.msra.mxu0 0.0
    %810 = vmatpush.msra.mxu0 0.0
    %811 = vmatpush.msra.mxu0 0.0
    %812 = vmatpush.msra.mxu0 0.0
    %813 = vmatpush.msra.mxu0 0.0
    %814 = vmatpush.msra.mxu0 0.0
    %815 = vmatpush.msra.mxu0 0.0
    %816 = vmatpush.msra.mxu0 0.0
    %817 = vmatpush.msra.mxu0 0.0
    %818 = vmatpush.msra.mxu0 %v799
    %819 = vmatpush.msra.mxu0 %v798
    %820 = vmatpush.msra.mxu0 %v797
    %821 = vmatpush.msra.mxu0 %v796
    %822 = vmatmul.f32.gmra.mxu0 %v801
    %v823 = vpop.f32.mrf.mxu0
    %v824 = vadd.f32 0.0, %v823
    %825 = vmatmul.f32.gmra.mxu0 %v804
    %v826 = vpop.f32.mrf.mxu0
    %v827 = vadd.f32 0.0, %v826
    %828 = vdwg.mxu0
    %v829 = vadd.f32 %v824, %v827
    %v830 = vrot.slane %v829, 4
    %v831 = vadd.f32 %v829, %v830
    %v832 = vrot.slane %v831, 2
    %v833 = vadd.f32 %v831, %v832
    %v834 = vrot.slane %v833, 1
    %v835 = vadd.f32 %v833, %v834
    %v836 = vmul.f32 %v835, %v165
    %v837 = vsub.f32 %v824, %v836
    %v838 = vsub.f32 %v827, %v836
    %v839 = vmul.f32 %v837, %v837
    %v840 = vmul.f32 %v838, %v838
    %v841 = vadd.f32 %v839, %v840
    %v842 = vrot.slane %v841, 4
    %v843 = vadd.f32 %v841, %v842
    %v844 = vrot.slane %v843, 2
    %v845 = vadd.f32 %v843, %v844
    %v846 = vrot.slane %v845, 1
    %v847 = vadd.f32 %v845, %v846
    %v848 = vmul.f32 %v847, %v165
    %v849 = vadd.f32 %v848, 1e-05
    %v850 = vrsqrt.pop %v849
    %v851 = vmul.f32 %v850, %v849
    %v852 = vmul.f32 %v851, %v850
    %v853 = vmul.f32 0.5, %v852
    %v854 = vsub.f32 1.5, %v853
    %v855 = vmul.f32 %v850, %v854
    %vm856 = vweird.f32 %v849
    %vm857 = vweird.f32 %v850
    %vm858 = vmor %vm856, %vm857
    %v859 = vsel %vm858, %v850, %v855
    %v860 = vmul.f32 %v837, %v859
    %v861 = vmul.f32 %v838, %v859
    %v862 = vld [vmem:[#allocation7 + $0x4] sm:$0x1]
    %v863 = vperm.slane %v862, 0
    %v864 = vmul.f32 %v860, %v863
    %v865 = vmul.f32 %v861, %v863
    %v866 = vld [vmem:[#allocation9 + $0x4] sm:$0x1]
    %v867 = vperm.slane %v866, 0
    %v868 = vadd.f32 %v864, %v867
    %v869 = vadd.f32 %v865, %v867
    %v870 = vadd.f32 %v622, %v868
    %v871 = vadd.f32 %v623, %v869
    %v872 = vmul.f32 %v870, 0.5
    %v873 = vmul.f32 %v871, 0.5
    %v874 = vmul.f32 %v870, 0.70710677
    %v875 = vmul.f32 %v871, 0.70710677
    %v876 = vmul.f32 %v874, %v874
    %v877 = vmin.f32 16.0, %v876
    %v878 = vmul.f32 %v877, 2.1237322e-06
    %v879 = vadd.f32 %v878, 0.00028619796
    %v880 = vmul.f32 %v877, %v879
    %v881 = vadd.f32 %v880, 0.0036580483
    %v882 = vmul.f32 %v877, %v881
    %v883 = vadd.f32 %v882, 0.05243302
    %v884 = vmul.f32 %v877, %v883
    %v885 = vadd.f32 %v884, 0.18741608
    %v886 = vmul.f32 %v877, %v885
    %v887 = vadd.f32 %v886, 1.1283791
    %v888 = vmul.f32 %v874, %v887
    %v889 = vmul.f32 %v877, 3.8918573e-05
    %v890 = vadd.f32 %v889, 0.001143296
    %v891 = vmul.f32 %v877, %v890
    %v892 = vadd.f32 %v891, 0.014752088
    %v893 = vmul.f32 %v877, %v892
    %v894 = vadd.f32 %v893, 0.112945676
    %v895 = vmul.f32 %v877, %v894
    %v896 = vadd.f32 %v895, 0.4994258
    %v897 = vmul.f32 %v877, %v896
    %v898 = vadd.f32 %v897, 1.0
    %v899 = vrcp.pop %v898
    %v900 = vmul.f32 %v898, %v899
    %v901 = vsub.f32 1.0, %v900
    %v902 = vmul.f32 %v899, %v901
    %v903 = vadd.f32 %v899, %v902
    %vm904 = vweird.f32 %v898
    %vm905 = vweird.f32 %v899
    %vm906 = vmor %vm904, %vm905
    %v907 = vsel %vm906, %v899, %v903
    %v908 = vand.u32 2147483647, %v898
    %vm909 = vcmp.eq.f32.partialorder %v908, 8.507059e+37
    %v910 = vand.u32 %v898, 2147483648
    %v911 = vor.u32 1.1754944e-38, %v910
    %v912 = vsel %vm909, %v911, %v907
    %v913 = vmul.f32 %v888, %v912
    %v914 = vmin.f32 %v913, 1.0
    %v915 = vmax.f32 %v914, -1.0
    %v916 = vmul.f32 %v875, %v875
    %v917 = vmin.f32 16.0, %v916
    %v918 = vmul.f32 %v917, 2.1237322e-06
    %v919 = vadd.f32 %v918, 0.00028619796
    %v920 = vmul.f32 %v917, %v919
    %v921 = vadd.f32 %v920, 0.0036580483
    %v922 = vmul.f32 %v917, %v921
    %v923 = vadd.f32 %v922, 0.05243302
    %v924 = vmul.f32 %v917, %v923
    %v925 = vadd.f32 %v924, 0.18741608
    %v926 = vmul.f32 %v917, %v925
    %v927 = vadd.f32 %v926, 1.1283791
    %v928 = vmul.f32 %v875, %v927
    %v929 = vmul.f32 %v917, 3.8918573e-05
    %v930 = vadd.f32 %v929, 0.001143296
    %v931 = vmul.f32 %v917, %v930
    %v932 = vadd.f32 %v931, 0.014752088
    %v933 = vmul.f32 %v917, %v932
    %v934 = vadd.f32 %v933, 0.112945676
    %v935 = vmul.f32 %v917, %v934
    %v936 = vadd.f32 %v935, 0.4994258
    %v937 = vmul.f32 %v917, %v936
    %v938 = vadd.f32 %v937, 1.0
    %v939 = vrcp.pop %v938
    %v940 = vmul.f32 %v938, %v939
    %v941 = vsub.f32 1.0, %v940
    %v942 = vmul.f32 %v939, %v941
    %v943 = vadd.f32 %v939, %v942
    %vm944 = vweird.f32 %v938
    %vm945 = vweird.f32 %v939
    %vm946 = vmor %vm944, %vm945
    %v947 = vsel %vm946, %v939, %v943
    %v948 = vand.u32 2147483647, %v938
    %vm949 = vcmp.eq.f32.partialorder %v948, 8.507059e+37
    %v950 = vand.u32 %v938, 2147483648
    %v951 = vor.u32 1.1754944e-38, %v950
    %v952 = vsel %vm949, %v951, %v947
    %v953 = vmul.f32 %v928, %v952
    %v954 = vmin.f32 %v953, 1.0
    %v955 = vmax.f32 %v954, -1.0
    %v956 = vadd.f32 %v915, 1.0
    %v957 = vadd.f32 %v955, 1.0
    %v958 = vmul.f32 %v872, %v956
    %v959 = vmul.f32 %v873, %v957
    %s960 = scalar_lea.vmem [#allocation6], 64
    %v961 = vld [vmem:[%s960] sm:$0xf]
    %v962 = vld [vmem:[%s960 + $0x4] sm:$0xf]
    %v963 = vld [vmem:[%s960 + $0x8] sm:$0xf]
    %v964 = vld [vmem:[%s960 + $0xc] sm:$0xf]
    %v965 = vunpack.c.l.bf16 %v961
    %v966 = vunpack.c.l.bf16 %v962
    %v967 = vunpack.c.l.bf16 %v963
    %v968 = vunpack.c.l.bf16 %v964
    %v970 = vsel %vm296, %v958, 0
    %v973 = vsel %vm296, %v959, 0
    %975 = vmatpush.msra.mxu0 0.0
    %976 = vmatpush.msra.mxu0 0.0
    %977 = vmatpush.msra.mxu0 0.0
    %978 = vmatpush.msra.mxu0 0.0
    %979 = vmatpush.msra.mxu0 0.0
    %980 = vmatpush.msra.mxu0 0.0
    %981 = vmatpush.msra.mxu0 0.0
    %982 = vmatpush.msra.mxu0 0.0
    %983 = vmatpush.msra.mxu0 0.0
    %984 = vmatpush.msra.mxu0 0.0
    %985 = vmatpush.msra.mxu0 0.0
    %986 = vmatpush.msra.mxu0 0.0
    %987 = vmatpush.msra.mxu0 %v968
    %988 = vmatpush.msra.mxu0 %v967
    %989 = vmatpush.msra.mxu0 %v966
    %990 = vmatpush.msra.mxu0 %v965
    %991 = vmatmul.f32.gmra.mxu0 %v970
    %v992 = vpop.f32.mrf.mxu0
    %v993 = vadd.f32 0.0, %v992
    %994 = vmatmul.f32.gmra.mxu0 %v973
    %v995 = vpop.f32.mrf.mxu0
    %v996 = vadd.f32 0.0, %v995
    %997 = vdwg.mxu0
    %v998 = vadd.f32 %v993, %v996
    %v999 = vrot.slane %v998, 4
    %v1000 = vadd.f32 %v998, %v999
    %v1001 = vrot.slane %v1000, 2
    %v1002 = vadd.f32 %v1000, %v1001
    %v1003 = vrot.slane %v1002, 1
    %v1004 = vadd.f32 %v1002, %v1003
    %v1005 = vmul.f32 %v1004, %v165
    %v1006 = vsub.f32 %v993, %v1005
    %v1007 = vsub.f32 %v996, %v1005
    %v1008 = vmul.f32 %v1006, %v1006
    %v1009 = vmul.f32 %v1007, %v1007
    %v1010 = vadd.f32 %v1008, %v1009
    %v1011 = vrot.slane %v1010, 4
    %v1012 = vadd.f32 %v1010, %v1011
    %v1013 = vrot.slane %v1012, 2
    %v1014 = vadd.f32 %v1012, %v1013
    %v1015 = vrot.slane %v1014, 1
    %v1016 = vadd.f32 %v1014, %v1015
    %v1017 = vmul.f32 %v1016, %v165
    %v1018 = vadd.f32 %v1017, 1e-05
    %v1019 = vrsqrt.pop %v1018
    %v1020 = vmul.f32 %v1019, %v1018
    %v1021 = vmul.f32 %v1020, %v1019
    %v1022 = vmul.f32 0.5, %v1021
    %v1023 = vsub.f32 1.5, %v1022
    %v1024 = vmul.f32 %v1019, %v1023
    %vm1025 = vweird.f32 %v1018
    %vm1026 = vweird.f32 %v1019
    %vm1027 = vmor %vm1025, %vm1026
    %v1028 = vsel %vm1027, %v1019, %v1024
    %v1029 = vmul.f32 %v1006, %v1028
    %v1030 = vmul.f32 %v1007, %v1028
    %v1031 = vld [vmem:[#allocation7 + $0x5] sm:$0x1]
    %v1032 = vperm.slane %v1031, 0
    %v1033 = vmul.f32 %v1029, %v1032
    %v1034 = vmul.f32 %v1030, %v1032
    %v1035 = vld [vmem:[#allocation9 + $0x5] sm:$0x1]
    %v1036 = vperm.slane %v1035, 0
    %v1037 = vadd.f32 %v1033, %v1036
    %v1038 = vadd.f32 %v1034, %v1036
    %v1039 = vmul.f32 %v1037, 0.5
    %v1040 = vmul.f32 %v1038, 0.5
    %v1041 = vmul.f32 %v1037, 0.70710677
    %v1042 = vmul.f32 %v1038, 0.70710677
    %v1043 = vmul.f32 %v1041, %v1041
    %v1044 = vmin.f32 16.0, %v1043
    %v1045 = vmul.f32 %v1044, 2.1237322e-06
    %v1046 = vadd.f32 %v1045, 0.00028619796
    %v1047 = vmul.f32 %v1044, %v1046
    %v1048 = vadd.f32 %v1047, 0.0036580483
    %v1049 = vmul.f32 %v1044, %v1048
    %v1050 = vadd.f32 %v1049, 0.05243302
    %v1051 = vmul.f32 %v1044, %v1050
    %v1052 = vadd.f32 %v1051, 0.18741608
    %v1053 = vmul.f32 %v1044, %v1052
    %v1054 = vadd.f32 %v1053, 1.1283791
    %v1055 = vmul.f32 %v1041, %v1054
    %v1056 = vmul.f32 %v1044, 3.8918573e-05
    %v1057 = vadd.f32 %v1056, 0.001143296
    %v1058 = vmul.f32 %v1044, %v1057
    %v1059 = vadd.f32 %v1058, 0.014752088
    %v1060 = vmul.f32 %v1044, %v1059
    %v1061 = vadd.f32 %v1060, 0.112945676
    %v1062 = vmul.f32 %v1044, %v1061
    %v1063 = vadd.f32 %v1062, 0.4994258
    %v1064 = vmul.f32 %v1044, %v1063
    %v1065 = vadd.f32 %v1064, 1.0
    %v1066 = vrcp.pop %v1065
    %v1067 = vmul.f32 %v1065, %v1066
    %v1068 = vsub.f32 1.0, %v1067
    %v1069 = vmul.f32 %v1066, %v1068
    %v1070 = vadd.f32 %v1066, %v1069
    %vm1071 = vweird.f32 %v1065
    %vm1072 = vweird.f32 %v1066
    %vm1073 = vmor %vm1071, %vm1072
    %v1074 = vsel %vm1073, %v1066, %v1070
    %v1075 = vand.u32 2147483647, %v1065
    %vm1076 = vcmp.eq.f32.partialorder %v1075, 8.507059e+37
    %v1077 = vand.u32 %v1065, 2147483648
    %v1078 = vor.u32 1.1754944e-38, %v1077
    %v1079 = vsel %vm1076, %v1078, %v1074
    %v1080 = vmul.f32 %v1055, %v1079
    %v1081 = vmin.f32 %v1080, 1.0
    %v1082 = vmax.f32 %v1081, -1.0
    %v1083 = vmul.f32 %v1042, %v1042
    %v1084 = vmin.f32 16.0, %v1083
    %v1085 = vmul.f32 %v1084, 2.1237322e-06
    %v1086 = vadd.f32 %v1085, 0.00028619796
    %v1087 = vmul.f32 %v1084, %v1086
    %v1088 = vadd.f32 %v1087, 0.0036580483
    %v1089 = vmul.f32 %v1084, %v1088
    %v1090 = vadd.f32 %v1089, 0.05243302
    %v1091 = vmul.f32 %v1084, %v1090
    %v1092 = vadd.f32 %v1091, 0.18741608
    %v1093 = vmul.f32 %v1084, %v1092
    %v1094 = vadd.f32 %v1093, 1.1283791
    %v1095 = vmul.f32 %v1042, %v1094
    %v1096 = vmul.f32 %v1084, 3.8918573e-05
    %v1097 = vadd.f32 %v1096, 0.001143296
    %v1098 = vmul.f32 %v1084, %v1097
    %v1099 = vadd.f32 %v1098, 0.014752088
    %v1100 = vmul.f32 %v1084, %v1099
    %v1101 = vadd.f32 %v1100, 0.112945676
    %v1102 = vmul.f32 %v1084, %v1101
    %v1103 = vadd.f32 %v1102, 0.4994258
    %v1104 = vmul.f32 %v1084, %v1103
    %v1105 = vadd.f32 %v1104, 1.0
    %v1106 = vrcp.pop %v1105
    %v1107 = vmul.f32 %v1105, %v1106
    %v1108 = vsub.f32 1.0, %v1107
    %v1109 = vmul.f32 %v1106, %v1108
    %v1110 = vadd.f32 %v1106, %v1109
    %vm1111 = vweird.f32 %v1105
    %vm1112 = vweird.f32 %v1106
    %vm1113 = vmor %vm1111, %vm1112
    %v1114 = vsel %vm1113, %v1106, %v1110
    %v1115 = vand.u32 2147483647, %v1105
    %vm1116 = vcmp.eq.f32.partialorder %v1115, 8.507059e+37
    %v1117 = vand.u32 %v1105, 2147483648
    %v1118 = vor.u32 1.1754944e-38, %v1117
    %v1119 = vsel %vm1116, %v1118, %v1114
    %v1120 = vmul.f32 %v1095, %v1119
    %v1121 = vmin.f32 %v1120, 1.0
    %v1122 = vmax.f32 %v1121, -1.0
    %v1123 = vadd.f32 %v1082, 1.0
    %v1124 = vadd.f32 %v1122, 1.0
    %v1125 = vmul.f32 %v1039, %v1123
    %v1126 = vmul.f32 %v1040, %v1124
    %s1127 = scalar_lea.vmem [#allocation6], 80
    %v1128 = vld [vmem:[%s1127] sm:$0xf]
    %v1129 = vld [vmem:[%s1127 + $0x4] sm:$0xf]
    %v1130 = vld [vmem:[%s1127 + $0x8] sm:$0xf]
    %v1131 = vld [vmem:[%s1127 + $0xc] sm:$0xf]
    %v1132 = vunpack.c.l.bf16 %v1128
    %v1133 = vunpack.c.l.bf16 %v1129
    %v1134 = vunpack.c.l.bf16 %v1130
    %v1135 = vunpack.c.l.bf16 %v1131
    %v1137 = vsel %vm296, %v1125, 0
    %v1140 = vsel %vm296, %v1126, 0
    %1142 = vmatpush.msra.mxu0 0.0
    %1143 = vmatpush.msra.mxu0 0.0
    %1144 = vmatpush.msra.mxu0 0.0
    %1145 = vmatpush.msra.mxu0 0.0
    %1146 = vmatpush.msra.mxu0 0.0
    %1147 = vmatpush.msra.mxu0 0.0
    %1148 = vmatpush.msra.mxu0 0.0
    %1149 = vmatpush.msra.mxu0 0.0
    %1150 = vmatpush.msra.mxu0 0.0
    %1151 = vmatpush.msra.mxu0 0.0
    %1152 = vmatpush.msra.mxu0 0.0
    %1153 = vmatpush.msra.mxu0 0.0
    %1154 = vmatpush.msra.mxu0 %v1135
    %1155 = vmatpush.msra.mxu0 %v1134
    %1156 = vmatpush.msra.mxu0 %v1133
    %1157 = vmatpush.msra.mxu0 %v1132
    %1158 = vmatmul.f32.gmra.mxu0 %v1137
    %v1159 = vpop.f32.mrf.mxu0
    %v1160 = vadd.f32 0.0, %v1159
    %1161 = vmatmul.f32.gmra.mxu0 %v1140
    %v1162 = vpop.f32.mrf.mxu0
    %v1163 = vadd.f32 0.0, %v1162
    %1164 = vdwg.mxu0
    %v1165 = vadd.f32 %v1160, %v1163
    %v1166 = vrot.slane %v1165, 4
    %v1167 = vadd.f32 %v1165, %v1166
    %v1168 = vrot.slane %v1167, 2
    %v1169 = vadd.f32 %v1167, %v1168
    %v1170 = vrot.slane %v1169, 1
    %v1171 = vadd.f32 %v1169, %v1170
    %v1172 = vmul.f32 %v1171, %v165
    %v1173 = vsub.f32 %v1160, %v1172
    %v1174 = vsub.f32 %v1163, %v1172
    %v1175 = vmul.f32 %v1173, %v1173
    %v1176 = vmul.f32 %v1174, %v1174
    %v1177 = vadd.f32 %v1175, %v1176
    %v1178 = vrot.slane %v1177, 4
    %v1179 = vadd.f32 %v1177, %v1178
    %v1180 = vrot.slane %v1179, 2
    %v1181 = vadd.f32 %v1179, %v1180
    %v1182 = vrot.slane %v1181, 1
    %v1183 = vadd.f32 %v1181, %v1182
    %v1184 = vmul.f32 %v1183, %v165
    %v1185 = vadd.f32 %v1184, 1e-05
    %v1186 = vrsqrt.pop %v1185
    %v1187 = vmul.f32 %v1186, %v1185
    %v1188 = vmul.f32 %v1187, %v1186
    %v1189 = vmul.f32 0.5, %v1188
    %v1190 = vsub.f32 1.5, %v1189
    %v1191 = vmul.f32 %v1186, %v1190
    %vm1192 = vweird.f32 %v1185
    %vm1193 = vweird.f32 %v1186
    %vm1194 = vmor %vm1192, %vm1193
    %v1195 = vsel %vm1194, %v1186, %v1191
    %v1196 = vmul.f32 %v1173, %v1195
    %v1197 = vmul.f32 %v1174, %v1195
    %v1198 = vld [vmem:[#allocation7 + $0x6] sm:$0x1]
    %v1199 = vperm.slane %v1198, 0
    %v1200 = vmul.f32 %v1196, %v1199
    %v1201 = vmul.f32 %v1197, %v1199
    %v1202 = vld [vmem:[#allocation9 + $0x6] sm:$0x1]
    %v1203 = vperm.slane %v1202, 0
    %v1204 = vadd.f32 %v1200, %v1203
    %v1205 = vadd.f32 %v1201, %v1203
    %v1206 = vadd.f32 %v958, %v1204
    %v1207 = vadd.f32 %v959, %v1205
    %v1208 = vmul.f32 %v1206, 0.5
    %v1209 = vmul.f32 %v1207, 0.5
    %v1210 = vmul.f32 %v1206, 0.70710677
    %v1211 = vmul.f32 %v1207, 0.70710677
    %v1212 = vmul.f32 %v1210, %v1210
    %v1213 = vmin.f32 16.0, %v1212
    %v1214 = vmul.f32 %v1213, 2.1237322e-06
    %v1215 = vadd.f32 %v1214, 0.00028619796
    %v1216 = vmul.f32 %v1213, %v1215
    %v1217 = vadd.f32 %v1216, 0.0036580483
    %v1218 = vmul.f32 %v1213, %v1217
    %v1219 = vadd.f32 %v1218, 0.05243302
    %v1220 = vmul.f32 %v1213, %v1219
    %v1221 = vadd.f32 %v1220, 0.18741608
    %v1222 = vmul.f32 %v1213, %v1221
    %v1223 = vadd.f32 %v1222, 1.1283791
    %v1224 = vmul.f32 %v1210, %v1223
    %v1225 = vmul.f32 %v1213, 3.8918573e-05
    %v1226 = vadd.f32 %v1225, 0.001143296
    %v1227 = vmul.f32 %v1213, %v1226
    %v1228 = vadd.f32 %v1227, 0.014752088
    %v1229 = vmul.f32 %v1213, %v1228
    %v1230 = vadd.f32 %v1229, 0.112945676
    %v1231 = vmul.f32 %v1213, %v1230
    %v1232 = vadd.f32 %v1231, 0.4994258
    %v1233 = vmul.f32 %v1213, %v1232
    %v1234 = vadd.f32 %v1233, 1.0
    %v1235 = vrcp.pop %v1234
    %v1236 = vmul.f32 %v1234, %v1235
    %v1237 = vsub.f32 1.0, %v1236
    %v1238 = vmul.f32 %v1235, %v1237
    %v1239 = vadd.f32 %v1235, %v1238
    %vm1240 = vweird.f32 %v1234
    %vm1241 = vweird.f32 %v1235
    %vm1242 = vmor %vm1240, %vm1241
    %v1243 = vsel %vm1242, %v1235, %v1239
    %v1244 = vand.u32 2147483647, %v1234
    %vm1245 = vcmp.eq.f32.partialorder %v1244, 8.507059e+37
    %v1246 = vand.u32 %v1234, 2147483648
    %v1247 = vor.u32 1.1754944e-38, %v1246
    %v1248 = vsel %vm1245, %v1247, %v1243
    %v1249 = vmul.f32 %v1224, %v1248
    %v1250 = vmin.f32 %v1249, 1.0
    %v1251 = vmax.f32 %v1250, -1.0
    %v1252 = vmul.f32 %v1211, %v1211
    %v1253 = vmin.f32 16.0, %v1252
    %v1254 = vmul.f32 %v1253, 2.1237322e-06
    %v1255 = vadd.f32 %v1254, 0.00028619796
    %v1256 = vmul.f32 %v1253, %v1255
    %v1257 = vadd.f32 %v1256, 0.0036580483
    %v1258 = vmul.f32 %v1253, %v1257
    %v1259 = vadd.f32 %v1258, 0.05243302
    %v1260 = vmul.f32 %v1253, %v1259
    %v1261 = vadd.f32 %v1260, 0.18741608
    %v1262 = vmul.f32 %v1253, %v1261
    %v1263 = vadd.f32 %v1262, 1.1283791
    %v1264 = vmul.f32 %v1211, %v1263
    %v1265 = vmul.f32 %v1253, 3.8918573e-05
    %v1266 = vadd.f32 %v1265, 0.001143296
    %v1267 = vmul.f32 %v1253, %v1266
    %v1268 = vadd.f32 %v1267, 0.014752088
    %v1269 = vmul.f32 %v1253, %v1268
    %v1270 = vadd.f32 %v1269, 0.112945676
    %v1271 = vmul.f32 %v1253, %v1270
    %v1272 = vadd.f32 %v1271, 0.4994258
    %v1273 = vmul.f32 %v1253, %v1272
    %v1274 = vadd.f32 %v1273, 1.0
    %v1275 = vrcp.pop %v1274
    %v1276 = vmul.f32 %v1274, %v1275
    %v1277 = vsub.f32 1.0, %v1276
    %v1278 = vmul.f32 %v1275, %v1277
    %v1279 = vadd.f32 %v1275, %v1278
    %vm1280 = vweird.f32 %v1274
    %vm1281 = vweird.f32 %v1275
    %vm1282 = vmor %vm1280, %vm1281
    %v1283 = vsel %vm1282, %v1275, %v1279
    %v1284 = vand.u32 2147483647, %v1274
    %vm1285 = vcmp.eq.f32.partialorder %v1284, 8.507059e+37
    %v1286 = vand.u32 %v1274, 2147483648
    %v1287 = vor.u32 1.1754944e-38, %v1286
    %v1288 = vsel %vm1285, %v1287, %v1283
    %v1289 = vmul.f32 %v1264, %v1288
    %v1290 = vmin.f32 %v1289, 1.0
    %v1291 = vmax.f32 %v1290, -1.0
    %v1292 = vadd.f32 %v1251, 1.0
    %v1293 = vadd.f32 %v1291, 1.0
    %v1294 = vmul.f32 %v1208, %v1292
    %v1295 = vmul.f32 %v1209, %v1293
    %s1296 = scalar_lea.vmem [#allocation6], 96
    %v1297 = vld [vmem:[%s1296] sm:$0xf]
    %v1298 = vld [vmem:[%s1296 + $0x4] sm:$0xf]
    %v1299 = vld [vmem:[%s1296 + $0x8] sm:$0xf]
    %v1300 = vld [vmem:[%s1296 + $0xc] sm:$0xf]
    %v1301 = vunpack.c.l.bf16 %v1297
    %v1302 = vunpack.c.l.bf16 %v1298
    %v1303 = vunpack.c.l.bf16 %v1299
    %v1304 = vunpack.c.l.bf16 %v1300
    %v1306 = vsel %vm296, %v1294, 0
    %v1309 = vsel %vm296, %v1295, 0
    %1311 = vmatpush.msra.mxu0 0.0
    %1312 = vmatpush.msra.mxu0 0.0
    %1313 = vmatpush.msra.mxu0 0.0
    %1314 = vmatpush.msra.mxu0 0.0
    %1315 = vmatpush.msra.mxu0 0.0
    %1316 = vmatpush.msra.mxu0 0.0
    %1317 = vmatpush.msra.mxu0 0.0
    %1318 = vmatpush.msra.mxu0 0.0
    %1319 = vmatpush.msra.mxu0 0.0
    %1320 = vmatpush.msra.mxu0 0.0
    %1321 = vmatpush.msra.mxu0 0.0
    %1322 = vmatpush.msra.mxu0 0.0
    %1323 = vmatpush.msra.mxu0 %v1304
    %1324 = vmatpush.msra.mxu0 %v1303
    %1325 = vmatpush.msra.mxu0 %v1302
    %1326 = vmatpush.msra.mxu0 %v1301
    %1327 = vmatmul.f32.gmra.mxu0 %v1306
    %v1328 = vpop.f32.mrf.mxu0
    %v1329 = vadd.f32 0.0, %v1328
    %1330 = vmatmul.f32.gmra.mxu0 %v1309
    %v1331 = vpop.f32.mrf.mxu0
    %v1332 = vadd.f32 0.0, %v1331
    %1333 = vdwg.mxu0
    %v1334 = vadd.f32 %v1329, %v1332
    %v1335 = vrot.slane %v1334, 4
    %v1336 = vadd.f32 %v1334, %v1335
    %v1337 = vrot.slane %v1336, 2
    %v1338 = vadd.f32 %v1336, %v1337
    %v1339 = vrot.slane %v1338, 1
    %v1340 = vadd.f32 %v1338, %v1339
    %v1341 = vmul.f32 %v1340, %v165
    %v1342 = vsub.f32 %v1329, %v1341
    %v1343 = vsub.f32 %v1332, %v1341
    %v1344 = vmul.f32 %v1342, %v1342
    %v1345 = vmul.f32 %v1343, %v1343
    %v1346 = vadd.f32 %v1344, %v1345
    %v1347 = vrot.slane %v1346, 4
    %v1348 = vadd.f32 %v1346, %v1347
    %v1349 = vrot.slane %v1348, 2
    %v1350 = vadd.f32 %v1348, %v1349
    %v1351 = vrot.slane %v1350, 1
    %v1352 = vadd.f32 %v1350, %v1351
    %v1353 = vmul.f32 %v1352, %v165
    %v1354 = vadd.f32 %v1353, 1e-05
    %v1355 = vrsqrt.pop %v1354
    %v1356 = vmul.f32 %v1355, %v1354
    %v1357 = vmul.f32 %v1356, %v1355
    %v1358 = vmul.f32 0.5, %v1357
    %v1359 = vsub.f32 1.5, %v1358
    %v1360 = vmul.f32 %v1355, %v1359
    %vm1361 = vweird.f32 %v1354
    %vm1362 = vweird.f32 %v1355
    %vm1363 = vmor %vm1361, %vm1362
    %v1364 = vsel %vm1363, %v1355, %v1360
    %v1365 = vmul.f32 %v1342, %v1364
    %v1366 = vmul.f32 %v1343, %v1364
    %v1367 = vld [vmem:[#allocation7 + $0x7] sm:$0x1]
    %v1368 = vperm.slane %v1367, 0
    %v1369 = vmul.f32 %v1365, %v1368
    %v1370 = vmul.f32 %v1366, %v1368
    %v1371 = vld [vmem:[#allocation9 + $0x7] sm:$0x1]
    %v1372 = vperm.slane %v1371, 0
    %v1373 = vadd.f32 %v1369, %v1372
    %v1374 = vadd.f32 %v1370, %v1372
    %v1375 = vmul.f32 %v1373, 0.5
    %v1376 = vmul.f32 %v1374, 0.5
    %v1377 = vmul.f32 %v1373, 0.70710677
    %v1378 = vmul.f32 %v1374, 0.70710677
    %v1379 = vmul.f32 %v1377, %v1377
    %v1380 = vmin.f32 16.0, %v1379
    %v1381 = vmul.f32 %v1380, 2.1237322e-06
    %v1382 = vadd.f32 %v1381, 0.00028619796
    %v1383 = vmul.f32 %v1380, %v1382
    %v1384 = vadd.f32 %v1383, 0.0036580483
    %v1385 = vmul.f32 %v1380, %v1384
    %v1386 = vadd.f32 %v1385, 0.05243302
    %v1387 = vmul.f32 %v1380, %v1386
    %v1388 = vadd.f32 %v1387, 0.18741608
    %v1389 = vmul.f32 %v1380, %v1388
    %v1390 = vadd.f32 %v1389, 1.1283791
    %v1391 = vmul.f32 %v1377, %v1390
    %v1392 = vmul.f32 %v1380, 3.8918573e-05
    %v1393 = vadd.f32 %v1392, 0.001143296
    %v1394 = vmul.f32 %v1380, %v1393
    %v1395 = vadd.f32 %v1394, 0.014752088
    %v1396 = vmul.f32 %v1380, %v1395
    %v1397 = vadd.f32 %v1396, 0.112945676
    %v1398 = vmul.f32 %v1380, %v1397
    %v1399 = vadd.f32 %v1398, 0.4994258
    %v1400 = vmul.f32 %v1380, %v1399
    %v1401 = vadd.f32 %v1400, 1.0
    %v1402 = vrcp.pop %v1401
    %v1403 = vmul.f32 %v1401, %v1402
    %v1404 = vsub.f32 1.0, %v1403
    %v1405 = vmul.f32 %v1402, %v1404
    %v1406 = vadd.f32 %v1402, %v1405
    %vm1407 = vweird.f32 %v1401
    %vm1408 = vweird.f32 %v1402
    %vm1409 = vmor %vm1407, %vm1408
    %v1410 = vsel %vm1409, %v1402, %v1406
    %v1411 = vand.u32 2147483647, %v1401
    %vm1412 = vcmp.eq.f32.partialorder %v1411, 8.507059e+37
    %v1413 = vand.u32 %v1401, 2147483648
    %v1414 = vor.u32 1.1754944e-38, %v1413
    %v1415 = vsel %vm1412, %v1414, %v1410
    %v1416 = vmul.f32 %v1391, %v1415
    %v1417 = vmin.f32 %v1416, 1.0
    %v1418 = vmax.f32 %v1417, -1.0
    %v1419 = vmul.f32 %v1378, %v1378
    %v1420 = vmin.f32 16.0, %v1419
    %v1421 = vmul.f32 %v1420, 2.1237322e-06
    %v1422 = vadd.f32 %v1421, 0.00028619796
    %v1423 = vmul.f32 %v1420, %v1422
    %v1424 = vadd.f32 %v1423, 0.0036580483
    %v1425 = vmul.f32 %v1420, %v1424
    %v1426 = vadd.f32 %v1425, 0.05243302
    %v1427 = vmul.f32 %v1420, %v1426
    %v1428 = vadd.f32 %v1427, 0.18741608
    %v1429 = vmul.f32 %v1420, %v1428
    %v1430 = vadd.f32 %v1429, 1.1283791
    %v1431 = vmul.f32 %v1378, %v1430
    %v1432 = vmul.f32 %v1420, 3.8918573e-05
    %v1433 = vadd.f32 %v1432, 0.001143296
    %v1434 = vmul.f32 %v1420, %v1433
    %v1435 = vadd.f32 %v1434, 0.014752088
    %v1436 = vmul.f32 %v1420, %v1435
    %v1437 = vadd.f32 %v1436, 0.112945676
    %v1438 = vmul.f32 %v1420, %v1437
    %v1439 = vadd.f32 %v1438, 0.4994258
    %v1440 = vmul.f32 %v1420, %v1439
    %v1441 = vadd.f32 %v1440, 1.0
    %v1442 = vrcp.pop %v1441
    %v1443 = vmul.f32 %v1441, %v1442
    %v1444 = vsub.f32 1.0, %v1443
    %v1445 = vmul.f32 %v1442, %v1444
    %v1446 = vadd.f32 %v1442, %v1445
    %vm1447 = vweird.f32 %v1441
    %vm1448 = vweird.f32 %v1442
    %vm1449 = vmor %vm1447, %vm1448
    %v1450 = vsel %vm1449, %v1442, %v1446
    %v1451 = vand.u32 2147483647, %v1441
    %vm1452 = vcmp.eq.f32.partialorder %v1451, 8.507059e+37
    %v1453 = vand.u32 %v1441, 2147483648
    %v1454 = vor.u32 1.1754944e-38, %v1453
    %v1455 = vsel %vm1452, %v1454, %v1450
    %v1456 = vmul.f32 %v1431, %v1455
    %v1457 = vmin.f32 %v1456, 1.0
    %v1458 = vmax.f32 %v1457, -1.0
    %v1459 = vadd.f32 %v1418, 1.0
    %v1460 = vadd.f32 %v1458, 1.0
    %v1461 = vmul.f32 %v1375, %v1459
    %v1462 = vmul.f32 %v1376, %v1460
    %v1463 = vld [vmem:[#allocation10] sm:$0xf]
    %v1464 = vld [vmem:[#allocation10 + $0x4] sm:$0xf]
    %v1465 = vld [vmem:[#allocation10 + $0x8] sm:$0xf]
    %v1466 = vld [vmem:[#allocation10 + $0xc] sm:$0xf]
    %v1467 = vunpack.c.l.bf16 %v1463
    %v1468 = vunpack.c.l.bf16 %v1464
    %v1469 = vunpack.c.l.bf16 %v1465
    %v1470 = vunpack.c.l.bf16 %v1466
    %v1471 = vld [vmem:[%s6] sm:$0x1]
    %v1473 = vperm.slane %v1471, 0
    %v1476 = vsel %vm296, %v1461, 0
    %v1479 = vsel %vm296, %v1462, 0
    %1481 = vmatpush.msra.mxu0 0.0
    %1482 = vmatpush.msra.mxu0 0.0
    %1483 = vmatpush.msra.mxu0 0.0
    %1484 = vmatpush.msra.mxu0 0.0
    %1485 = vmatpush.msra.mxu0 0.0
    %1486 = vmatpush.msra.mxu0 0.0
    %1487 = vmatpush.msra.mxu0 0.0
    %1488 = vmatpush.msra.mxu0 0.0
    %1489 = vmatpush.msra.mxu0 0.0
    %1490 = vmatpush.msra.mxu0 0.0
    %1491 = vmatpush.msra.mxu0 0.0
    %1492 = vmatpush.msra.mxu0 0.0
    %1493 = vmatpush.msra.mxu0 %v1470
    %1494 = vmatpush.msra.mxu0 %v1469
    %1495 = vmatpush.msra.mxu0 %v1468
    %1496 = vmatpush.msra.mxu0 %v1467
    %1497 = vmatmul.f32.gmra.mxu0 %v1476
    %v1498 = vpop.f32.mrf.mxu0
    %v1499 = vadd.f32 %v1473, %v1498
    %1500 = vmatmul.f32.gmra.mxu0 %v1479
    %v1501 = vpop.f32.mrf.mxu0
    %v1502 = vadd.f32 %v1473, %v1501
    %1503 = vdwg.mxu0
    %1504 = vst [vmem:[%s7] sm:$0xff] %v1499
    %1505 = vst [vmem:[%s7 + $0x8] sm:$0xff] %v1502
    // Predicated region
    $region54: #{improved_dnn_forward.1} parent=1 // pred_check
      _
    $region55: #{improved_dnn_forward.1} parent=1 // pred_check_branch
      %1507 = sbr.rel (0) target = $region57
    $region56: #{improved_dnn_forward.1} parent=1 // pred_region
      _
    $region57: #{improved_dnn_forward.1} parent=1 // pred_fallthru
      _
    // Predicated region
    $region58: #{improved_dnn_forward.1} parent=1 // pred_check
      _
    $region59: #{improved_dnn_forward.1} parent=1 // pred_check_branch
      %1509 = sbr.rel (0) target = $region61
    $region60: #{improved_dnn_forward.1} parent=1 // pred_region
      _
    $region61: #{improved_dnn_forward.1} parent=1 // pred_fallthru
      _
    %1510 = vsyncpa [#allocation3], 1
    %1511 = vsyncpa [#allocation5], 1
    %1512 = vsyncpa [#allocation8], 1
    %1513 = vsyncpa [#allocation11], 1

</llo_original>
